<compile_context>
chip_gen: v7x
topology: tpu7x:2x2x1
jax: 0.10.0
libtpu: 0.0.40
codegen_flags: <defaults>
</compile_context>

<pallas_src>
import functools
import numpy as np
import jax
import jax.numpy as jnp
from jax.experimental import pallas as pl
from jax.experimental.pallas import tpu as pltpu


# ----------------------------------------------------------------------------
# Fused Pallas kernel
# ----------------------------------------------------------------------------
def make_fused_kernel(shifts, n_later, t_full):
    """Fused kernel: all FFTNetBlocks (bands packed along lanes) + final linear.

    shifts:  static tuple of layer shifts, layer 0 (largest shift) first.
    n_later: number of layers after layer 0.
    t_full:  static full time length kept through every layer.
    """

    def combine(y, shift, b_ref, wo_ref, bo_ref):
        # y: (T, 2*CP) — fused left|right matmul result.  Split at the lane-128
        # boundary (free), align the right branch with a sublane roll (XLU),
        # keep full length T (garbage tail is cropped at the final store).
        cp = b_ref.shape[-1]
        yr = pltpu.roll(y[:, cp:], shift=t_full - shift, axis=0)
        s = y[:, :cp] + yr + b_ref[...]           # pre-ReLU sum == residual
        z = jnp.maximum(s, 0.0)
        out = jnp.dot(z, wo_ref[...], preferred_element_type=jnp.float32) \
            + bo_ref[...] + s
        return jnp.maximum(out, 0.0)

    def kernel(*refs):
        x_ref, h_ref = refs[0], refs[1]                   # layer-0 inputs
        w0x_ref, w0h_ref, b0_ref, wo0_ref, bo0_ref = refs[2:7]
        later = refs[7:7 + 4 * n_later]                   # 4 refs per later layer
        wlin_ref, blin_ref, o_ref = refs[7 + 4 * n_later:]

        # Layer 0: x (bands, with x2 folded into column 0) + h contributions.
        y0 = jnp.dot(x_ref[0], w0x_ref[...], preferred_element_type=jnp.float32) \
           + jnp.dot(h_ref[0], w0h_ref[...], preferred_element_type=jnp.float32)
        act = combine(y0, shifts[0], b0_ref, wo0_ref, bo0_ref)   # (T, CP)

        for li in range(n_later):                         # unrolled, VMEM-resident
            wlr_ref, b_ref, wo_ref, bo_ref = later[4 * li:4 * li + 4]
            y = jnp.dot(act, wlr_ref[...], preferred_element_type=jnp.float32)
            act = combine(y, shifts[li + 1], b_ref, wo_ref, bo_ref)

        y = jnp.dot(act, wlin_ref[...], preferred_element_type=jnp.float32) \
            + blin_ref[...]
        o_ref[0] = y[: o_ref.shape[1]].astype(o_ref.dtype)   # crop garbage tail

    return kernel


# ----------------------------------------------------------------------------
# Wrapper (single pallas_call for the whole network)
# ----------------------------------------------------------------------------
def subband_fftnet_forward(packed, x, h):
    """
    x: (B, num_band, T, 1)  — matches torch x[:, band] of shape (B, T, 1)
    h: (B, C_h, T_h)        — torch channels-first local condition
    returns: (B, num_band, quantization_channels, T_out), matching
             torch.stack((out1, out2, out3, out4), 1).
    """
    shifts = packed['shifts']
    B, NB, T, _ = x.shape
    LC = h.shape[1]
    CP = packed['wo0'].shape[1]            # num_band * fft_channels (packed lanes)
    QP = packed['wlin'].shape[1]           # num_band * quantization_channels
    Q = QP // NB
    T_out = T - sum(shifts)

    # Two separate channels-last inputs (no wrapper-side concat / HBM round trip):
    x_cl = jnp.transpose(x[..., 0], (0, 2, 1))             # (B, T, NB)
    h_cl = jnp.transpose(h, (0, 2, 1))[:, -T:, :]          # (B, T, LC) == h[:, :, -T:]

    inputs = [x_cl, h_cl]
    in_specs = [pl.BlockSpec((1, T, NB), lambda b: (b, 0, 0)),
                pl.BlockSpec((1, T, LC), lambda b: (b, 0, 0))]

    weight_bytes = 0

    def add_w(w):
        nonlocal weight_bytes
        inputs.append(w)
        weight_bytes += int(w.size) * w.dtype.itemsize
        # Grid-invariant index_map: weights staged once, not per batch step.
        in_specs.append(pl.BlockSpec(w.shape, lambda b: (0, 0)))

    for name in ('w0x_lr', 'w0h_lr', 'b0', 'wo0', 'bo0'):
        add_w(packed[name])
    for lp in packed['later']:
        for name in ('wlr', 'b', 'wo', 'bo'):
            add_w(lp[name])
    add_w(packed['wlin'])
    add_w(packed['blin'])

    # Advisory cost estimate so XLA schedules the tiny surrounding ops sensibly.
    def dot_flops(K, N):
        return 2 * T * K * N
    flops_item = dot_flops(NB, 2 * CP) + dot_flops(LC, 2 * CP) + dot_flops(CP, CP)
    for _ in packed['later']:
        flops_item += dot_flops(CP, 2 * CP) + dot_flops(CP, CP)
    flops_item += dot_flops(CP, QP)
    bytes_accessed = (int(x_cl.size) + int(h_cl.size)) * 4 + weight_bytes \
        + B * T_out * QP * 4
    cost = pl.CostEstimate(flops=B * flops_item, transcendentals=0,
                           bytes_accessed=int(bytes_accessed))

    kernel = make_fused_kernel(shifts, len(packed['later']), T)
    out = pl.pallas_call(
        kernel,
        out_shape=jax.ShapeDtypeStruct((B, T_out, QP), jnp.float32),
        grid=(B,),
        in_specs=in_specs,
        out_specs=pl.BlockSpec((1, T_out, QP), lambda b: (b, 0, 0)),
        compiler_params=pltpu.CompilerParams(
            dimension_semantics=("parallel",),      # v7x: batch across both TCs
            vmem_limit_bytes=32 * 1024 * 1024),     # above v5e's 16 MiB default
        cost_estimate=cost,
    )(*inputs)

    # (B, T_out, NB*Q) -> (B, NB, Q, T_out)
    out = out.reshape(B, T_out, NB, Q)
    return jnp.transpose(out, (0, 2, 3, 1))


# ----------------------------------------------------------------------------
# Parameter init (deterministic, synthetic — mirrors the module's shapes)
# ----------------------------------------------------------------------------
def _init_conv(key, cin, cout):
    kw, kb = jax.random.split(key)
    scale = 1.0 / np.sqrt(cin)
    w = jax.random.uniform(kw, (cin, cout), jnp.float32, -scale, scale)
    b = jax.random.uniform(kb, (1, cout), jnp.float32, -scale, scale)
    return w, b


def init_subband_params(key, num_band, n_stacks, fft_channels,
                        quantization_channels, local_condition_channels):
    shifts = [2 ** i for i in range(n_stacks)]
    bands = []
    for band in range(num_band):
        bkey = jax.random.fold_in(key, band)
        layers = []
        for li, shift in enumerate(reversed(shifts)):
            lkey = jax.random.fold_in(bkey, li)
            first = (li == 0)
            cin = 1 if first else fft_channels
            p = {'shift': shift}
            p['w_x1l'], p['b_x1l'] = _init_conv(jax.random.fold_in(lkey, 0), cin, fft_channels)
            p['w_x1r'], p['b_x1r'] = _init_conv(jax.random.fold_in(lkey, 1), cin, fft_channels)
            if first:
                p['w_x2l'], p['b_x2l'] = _init_conv(jax.random.fold_in(lkey, 2), cin, fft_channels)
                p['w_x2r'], p['b_x2r'] = _init_conv(jax.random.fold_in(lkey, 3), cin, fft_channels)
                p['w_hl'], p['b_hl'] = _init_conv(jax.random.fold_in(lkey, 4),
                                                  local_condition_channels, fft_channels)
                p['w_hr'], p['b_hr'] = _init_conv(jax.random.fold_in(lkey, 5),
                                                  local_condition_channels, fft_channels)
            p['w_out'], p['b_out'] = _init_conv(jax.random.fold_in(lkey, 6),
                                                fft_channels, fft_channels)
            layers.append(p)
        lw, lb = _init_conv(jax.random.fold_in(bkey, 999),
                            fft_channels, quantization_channels)
        bands.append({'layers': layers, 'linear_w': lw, 'linear_b': lb})
    return bands
    # TODO(synk): Subband_FFTNet.__init__ also builds an unused top-level
    # nn.Linear (never referenced in forward) — intentionally not materialized.


def pack_subband_params(bands, local_condition_channels):
    """One-time host-side transform: block-diagonal lane packing of all bands
    plus fusion of the left/right weights into a single (K, 2*CP) matrix."""
    NB = len(bands)
    F = bands[0]['layers'][0]['w_out'].shape[0]
    LC = local_condition_channels
    n_layers = len(bands[0]['layers'])
    shifts = tuple(bands[0]['layers'][li]['shift'] for li in range(n_layers))
    CP = NB * F

    def blk_diag(mats):
        rows = sum(m.shape[0] for m in mats)
        cols = sum(m.shape[1] for m in mats)
        out = np.zeros((rows, cols), np.float32)
        i = j = 0
        for m in mats:
            mm = np.asarray(m)
            out[i:i + mm.shape[0], j:j + mm.shape[1]] = mm
            i += mm.shape[0]
            j += mm.shape[1]
        return out

    # --- layer 0 (largest shift): x1 / x2(=band-0 x1) / h branches packed,
    #     left|right fused along the output (lane) axis ---
    w0x_lr = np.zeros((NB, 2 * CP), np.float32)
    w0h_lr = np.zeros((LC, 2 * CP), np.float32)
    b0 = np.zeros((1, CP), np.float32)
    wo0_blocks, bo0 = [], []
    for band in range(NB):
        p = bands[band]['layers'][0]
        c0, c1 = band * F, (band + 1) * F
        w0x_lr[band, c0:c1] = np.asarray(p['w_x1l'])[0]
        w0x_lr[band, CP + c0:CP + c1] = np.asarray(p['w_x1r'])[0]
        bias = np.asarray(p['b_x1l'] + p['b_x1r'] + p['b_hl'] + p['b_hr'])[0]
        if band > 0:                                   # x2 path uses band-0 input (col 0)
            w0x_lr[0, c0:c1] = np.asarray(p['w_x2l'])[0]
            w0x_lr[0, CP + c0:CP + c1] = np.asarray(p['w_x2r'])[0]
            bias = bias + np.asarray(p['b_x2l'] + p['b_x2r'])[0]
        w0h_lr[:, c0:c1] = np.asarray(p['w_hl'])
        w0h_lr[:, CP + c0:CP + c1] = np.asarray(p['w_hr'])
        b0[0, c0:c1] = bias
        wo0_blocks.append(p['w_out'])
        bo0.append(np.asarray(p['b_out']))

    packed = {
        'shifts': shifts,
        'w0x_lr': jnp.asarray(w0x_lr),
        'w0h_lr': jnp.asarray(w0h_lr),
        'b0': jnp.asarray(b0),
        'wo0': jnp.asarray(blk_diag(wo0_blocks)),
        'bo0': jnp.asarray(np.concatenate(bo0, axis=1)),
        'later': [],
    }

    # --- layers 1..n-1: x1 branch only, block-diagonal over bands, L|R fused ---
    for li in range(1, n_layers):
        ps = [bands[b]['layers'][li] for b in range(NB)]
        wl = blk_diag([p['w_x1l'] for p in ps])
        wr = blk_diag([p['w_x1r'] for p in ps])
        packed['later'].append({
            'wlr': jnp.asarray(np.concatenate([wl, wr], axis=1)),
            'b': jnp.asarray(np.concatenate(
                [np.asarray(p['b_x1l'] + p['b_x1r']) for p in ps], axis=1)),
            'wo': jnp.asarray(blk_diag([p['w_out'] for p in ps])),
            'bo': jnp.asarray(np.concatenate(
                [np.asarray(p['b_out']) for p in ps], axis=1)),
        })

    # --- final per-band linear, packed ---
    packed['wlin'] = jnp.asarray(blk_diag([bands[b]['linear_w'] for b in range(NB)]))
    packed['blin'] = jnp.asarray(np.concatenate(
        [np.asarray(bands[b]['linear_b']) for b in range(NB)], axis=1))
    return packed


# ----------------------------------------------------------------------------
# Pure-JAX reference (direct translation of the PyTorch forward) for checking
# ----------------------------------------------------------------------------
def _ref_forward(bands, x, h):
    h_cl = jnp.transpose(h, (0, 2, 1))
    outs = []
    for band, bp in enumerate(bands):
        x1 = x[:, band]                        # (B, T, 1) channels-last
        x2 = None if band == 0 else x[:, 0]
        out = x1
        for li, lp in enumerate(bp['layers']):
            s = lp['shift']
            T = out.shape[1]
            conv = lambda v, w, b: v @ w + b
            z_sum = conv(out[:, :T - s], lp['w_x1l'], lp['b_x1l']) \
                  + conv(out[:, s:], lp['w_x1r'], lp['b_x1r'])
            if li == 0:
                hh = h_cl[:, -T:, :]
                z_sum = z_sum + conv(hh[:, :T - s], lp['w_hl'], lp['b_hl']) \
                              + conv(hh[:, s:], lp['w_hr'], lp['b_hr'])
                if x2 is not None:
                    z_sum = z_sum + conv(x2[:, :T - s], lp['w_x2l'], lp['b_x2l']) \
                                  + conv(x2[:, s:], lp['w_x2r'], lp['b_x2r'])
            z = jax.nn.relu(z_sum)
            out = jax.nn.relu(conv(z, lp['w_out'], lp['b_out']) + z_sum)
        y = out @ bp['linear_w'] + bp['linear_b']          # (B, T_out, Q)
        outs.append(jnp.transpose(y, (0, 2, 1)))           # (B, Q, T_out)
    return jnp.stack(outs, axis=1)                          # (B, NB, Q, T_out)


# ----------------------------------------------------------------------------
if __name__ == "__main__":
    B = 2
    NUM_BAND = 4
    N_STACKS = 3                     # shifts [1, 2, 4], receptive_field = 8
    FFT_CH = 32                      # 4 bands * 32 = 128 packed lanes
    QUANT_CH = 32
    LC_CH = 8
    T = 16                           # input samples per band
    T_H = 20                         # local-condition length (>= T)

    key = jax.random.PRNGKey(0)
    kx, kh, kp = jax.random.split(key, 3)
    x = jax.random.normal(kx, (B, NUM_BAND, T, 1), jnp.float32)
    h = jax.random.normal(kh, (B, LC_CH, T_H), jnp.float32)

    bands = init_subband_params(kp, NUM_BAND, N_STACKS, FFT_CH, QUANT_CH, LC_CH)
    packed = pack_subband_params(bands, LC_CH)

    fwd = jax.jit(functools.partial(subband_fftnet_forward, packed))
    out = jax.block_until_ready(fwd(x, h))

    T_out = T - sum(2 ** i for i in range(N_STACKS))   # 16 - 7 = 9
    assert out.shape == (B, NUM_BAND, QUANT_CH, T_out), out.shape
    assert bool(jnp.all(jnp.isfinite(out)))

    with jax.default_matmul_precision("highest"):
        ref = jax.block_until_ready(_ref_forward(bands, x, h))
    assert bool(jnp.allclose(out, ref, atol=2e-3, rtol=2e-3)), \
        float(jnp.max(jnp.abs(out - ref)))

    print("KERNEL_OK")
</pallas_src>

<mosaic_0001>
module attributes {stable_mosaic.version = 11 : i64} {
  func.func @kernel(%arg0: i32, %arg1: memref<1x16x4xf32, #tpu.memory_space<vmem>>, %arg2: memref<1x16x8xf32, #tpu.memory_space<vmem>>, %arg3: memref<4x256xf32, #tpu.memory_space<vmem>>, %arg4: memref<8x256xf32, #tpu.memory_space<vmem>>, %arg5: memref<1x128xf32, #tpu.memory_space<vmem>>, %arg6: memref<128x128xf32, #tpu.memory_space<vmem>>, %arg7: memref<1x128xf32, #tpu.memory_space<vmem>>, %arg8: memref<128x256xf32, #tpu.memory_space<vmem>>, %arg9: memref<1x128xf32, #tpu.memory_space<vmem>>, %arg10: memref<128x128xf32, #tpu.memory_space<vmem>>, %arg11: memref<1x128xf32, #tpu.memory_space<vmem>>, %arg12: memref<128x256xf32, #tpu.memory_space<vmem>>, %arg13: memref<1x128xf32, #tpu.memory_space<vmem>>, %arg14: memref<128x128xf32, #tpu.memory_space<vmem>>, %arg15: memref<1x128xf32, #tpu.memory_space<vmem>>, %arg16: memref<128x128xf32, #tpu.memory_space<vmem>>, %arg17: memref<1x128xf32, #tpu.memory_space<vmem>>, %arg18: memref<1x9x128xf32, #tpu.memory_space<vmem>>) attributes {dimension_semantics = [#tpu.dimension_semantics<parallel>], iteration_bounds = array<i64: 2>, scalar_prefetch = 0 : i64, scratch_operands = 0 : i64, tpu.core_type = #tpu.core_type<tc>, window_params = [{transform_indices = @transform_0, window_bounds = array<i64: 1, 16, 4>}, {transform_indices = @transform_1, window_bounds = array<i64: 1, 16, 8>}, {pipeline_mode = #tpu.pipeline_mode<synchronous>, transform_indices = @transform_2, window_bounds = array<i64: 4, 256>}, {pipeline_mode = #tpu.pipeline_mode<synchronous>, transform_indices = @transform_3, window_bounds = array<i64: 8, 256>}, {pipeline_mode = #tpu.pipeline_mode<synchronous>, transform_indices = @transform_4, window_bounds = array<i64: 1, 128>}, {pipeline_mode = #tpu.pipeline_mode<synchronous>, transform_indices = @transform_5, window_bounds = array<i64: 128, 128>}, {pipeline_mode = #tpu.pipeline_mode<synchronous>, transform_indices = @transform_6, window_bounds = array<i64: 1, 128>}, {pipeline_mode = #tpu.pipeline_mode<synchronous>, transform_indices = @transform_7, window_bounds = array<i64: 128, 256>}, {pipeline_mode = #tpu.pipeline_mode<synchronous>, transform_indices = @transform_8, window_bounds = array<i64: 1, 128>}, {pipeline_mode = #tpu.pipeline_mode<synchronous>, transform_indices = @transform_9, window_bounds = array<i64: 128, 128>}, {pipeline_mode = #tpu.pipeline_mode<synchronous>, transform_indices = @transform_10, window_bounds = array<i64: 1, 128>}, {pipeline_mode = #tpu.pipeline_mode<synchronous>, transform_indices = @transform_11, window_bounds = array<i64: 128, 256>}, {pipeline_mode = #tpu.pipeline_mode<synchronous>, transform_indices = @transform_12, window_bounds = array<i64: 1, 128>}, {pipeline_mode = #tpu.pipeline_mode<synchronous>, transform_indices = @transform_13, window_bounds = array<i64: 128, 128>}, {pipeline_mode = #tpu.pipeline_mode<synchronous>, transform_indices = @transform_14, window_bounds = array<i64: 1, 128>}, {pipeline_mode = #tpu.pipeline_mode<synchronous>, transform_indices = @transform_15, window_bounds = array<i64: 128, 128>}, {pipeline_mode = #tpu.pipeline_mode<synchronous>, transform_indices = @transform_16, window_bounds = array<i64: 1, 128>}, {transform_indices = @transform_17, window_bounds = array<i64: 1, 9, 128>}]} {
    %c0 = arith.constant 0 : index
    %c0_0 = arith.constant 0 : index
    %c0_1 = arith.constant 0 : index
    %0 = vector.load %arg1[%c0, %c0_0, %c0_1] : memref<1x16x4xf32, #tpu.memory_space<vmem>>, vector<1x16x4xf32>
    %1 = vector.shape_cast %0 : vector<1x16x4xf32> to vector<16x4xf32>
    %c0_2 = arith.constant 0 : index
    %c0_3 = arith.constant 0 : index
    %2 = vector.load %arg3[%c0_2, %c0_3] : memref<4x256xf32, #tpu.memory_space<vmem>>, vector<4x256xf32>
    %cst = arith.constant dense<0.000000e+00> : vector<16x256xf32>
    %3 = tpu.matmul %1, %2, %cst {dimension_numbers = #tpu.dot_dimension_numbers<[1], [0], [0], [1], [0, 0, 1, 1], [], []>} : vector<16x4xf32>, vector<4x256xf32>, vector<16x256xf32> -> vector<16x256xf32>
    %c0_4 = arith.constant 0 : index
    %c0_5 = arith.constant 0 : index
    %c0_6 = arith.constant 0 : index
    %4 = vector.load %arg2[%c0_4, %c0_5, %c0_6] : memref<1x16x8xf32, #tpu.memory_space<vmem>>, vector<1x16x8xf32>
    %5 = vector.shape_cast %4 : vector<1x16x8xf32> to vector<16x8xf32>
    %c0_7 = arith.constant 0 : index
    %c0_8 = arith.constant 0 : index
    %6 = vector.load %arg4[%c0_7, %c0_8] : memref<8x256xf32, #tpu.memory_space<vmem>>, vector<8x256xf32>
    %cst_9 = arith.constant dense<0.000000e+00> : vector<16x256xf32>
    %7 = tpu.matmul %5, %6, %cst_9 {dimension_numbers = #tpu.dot_dimension_numbers<[1], [0], [0], [1], [0, 0, 1, 1], [], []>} : vector<16x8xf32>, vector<8x256xf32>, vector<16x256xf32> -> vector<16x256xf32>
    %8 = arith.addf %3, %7 : vector<16x256xf32>
    %9 = vector.extract_strided_slice %8 {offsets = [0, 128], sizes = [16, 128], strides = [1, 1]} : vector<16x256xf32> to vector<16x128xf32>
    %c12_i32 = arith.constant 12 : i32
    %10 = tpu.dynamic_rotate %9 by %c12_i32 dim 0 : vector<16x128xf32>, i32 -> vector<16x128xf32>
    %11 = vector.extract_strided_slice %8 {offsets = [0, 0], sizes = [16, 128], strides = [1, 1]} : vector<16x256xf32> to vector<16x128xf32>
    %12 = arith.addf %11, %10 : vector<16x128xf32>
    %c0_10 = arith.constant 0 : index
    %c0_11 = arith.constant 0 : index
    %13 = vector.load %arg5[%c0_10, %c0_11] : memref<1x128xf32, #tpu.memory_space<vmem>>, vector<1x128xf32>
    %14 = vector.broadcast %13 : vector<1x128xf32> to vector<16x128xf32>
    %15 = arith.addf %12, %14 : vector<16x128xf32>
    %cst_12 = arith.constant 0.000000e+00 : f32
    %16 = vector.broadcast %cst_12 : f32 to vector<16x128xf32>
    %17 = arith.maximumf %15, %16 : vector<16x128xf32>
    %c0_13 = arith.constant 0 : index
    %c0_14 = arith.constant 0 : index
    %18 = vector.load %arg6[%c0_13, %c0_14] : memref<128x128xf32, #tpu.memory_space<vmem>>, vector<128x128xf32>
    %cst_15 = arith.constant dense<0.000000e+00> : vector<16x128xf32>
    %19 = tpu.matmul %17, %18, %cst_15 {dimension_numbers = #tpu.dot_dimension_numbers<[1], [0], [0], [1], [0, 0, 1, 1], [], []>} : vector<16x128xf32>, vector<128x128xf32>, vector<16x128xf32> -> vector<16x128xf32>
    %c0_16 = arith.constant 0 : index
    %c0_17 = arith.constant 0 : index
    %20 = vector.load %arg7[%c0_16, %c0_17] : memref<1x128xf32, #tpu.memory_space<vmem>>, vector<1x128xf32>
    %21 = vector.broadcast %20 : vector<1x128xf32> to vector<16x128xf32>
    %22 = arith.addf %19, %21 : vector<16x128xf32>
    %23 = arith.addf %22, %15 : vector<16x128xf32>
    %cst_18 = arith.constant 0.000000e+00 : f32
    %24 = vector.broadcast %cst_18 : f32 to vector<16x128xf32>
    %25 = arith.maximumf %23, %24 : vector<16x128xf32>
    %c0_19 = arith.constant 0 : index
    %c0_20 = arith.constant 0 : index
    %26 = vector.load %arg8[%c0_19, %c0_20] : memref<128x256xf32, #tpu.memory_space<vmem>>, vector<128x256xf32>
    %cst_21 = arith.constant dense<0.000000e+00> : vector<16x256xf32>
    %27 = tpu.matmul %25, %26, %cst_21 {dimension_numbers = #tpu.dot_dimension_numbers<[1], [0], [0], [1], [0, 0, 1, 1], [], []>} : vector<16x128xf32>, vector<128x256xf32>, vector<16x256xf32> -> vector<16x256xf32>
    %28 = vector.extract_strided_slice %27 {offsets = [0, 128], sizes = [16, 128], strides = [1, 1]} : vector<16x256xf32> to vector<16x128xf32>
    %c14_i32 = arith.constant 14 : i32
    %29 = tpu.dynamic_rotate %28 by %c14_i32 dim 0 : vector<16x128xf32>, i32 -> vector<16x128xf32>
    %30 = vector.extract_strided_slice %27 {offsets = [0, 0], sizes = [16, 128], strides = [1, 1]} : vector<16x256xf32> to vector<16x128xf32>
    %31 = arith.addf %30, %29 : vector<16x128xf32>
    %c0_22 = arith.constant 0 : index
    %c0_23 = arith.constant 0 : index
    %32 = vector.load %arg9[%c0_22, %c0_23] : memref<1x128xf32, #tpu.memory_space<vmem>>, vector<1x128xf32>
    %33 = vector.broadcast %32 : vector<1x128xf32> to vector<16x128xf32>
    %34 = arith.addf %31, %33 : vector<16x128xf32>
    %cst_24 = arith.constant 0.000000e+00 : f32
    %35 = vector.broadcast %cst_24 : f32 to vector<16x128xf32>
    %36 = arith.maximumf %34, %35 : vector<16x128xf32>
    %c0_25 = arith.constant 0 : index
    %c0_26 = arith.constant 0 : index
    %37 = vector.load %arg10[%c0_25, %c0_26] : memref<128x128xf32, #tpu.memory_space<vmem>>, vector<128x128xf32>
    %cst_27 = arith.constant dense<0.000000e+00> : vector<16x128xf32>
    %38 = tpu.matmul %36, %37, %cst_27 {dimension_numbers = #tpu.dot_dimension_numbers<[1], [0], [0], [1], [0, 0, 1, 1], [], []>} : vector<16x128xf32>, vector<128x128xf32>, vector<16x128xf32> -> vector<16x128xf32>
    %c0_28 = arith.constant 0 : index
    %c0_29 = arith.constant 0 : index
    %39 = vector.load %arg11[%c0_28, %c0_29] : memref<1x128xf32, #tpu.memory_space<vmem>>, vector<1x128xf32>
    %40 = vector.broadcast %39 : vector<1x128xf32> to vector<16x128xf32>
    %41 = arith.addf %38, %40 : vector<16x128xf32>
    %42 = arith.addf %41, %34 : vector<16x128xf32>
    %cst_30 = arith.constant 0.000000e+00 : f32
    %43 = vector.broadcast %cst_30 : f32 to vector<16x128xf32>
    %44 = arith.maximumf %42, %43 : vector<16x128xf32>
    %c0_31 = arith.constant 0 : index
    %c0_32 = arith.constant 0 : index
    %45 = vector.load %arg12[%c0_31, %c0_32] : memref<128x256xf32, #tpu.memory_space<vmem>>, vector<128x256xf32>
    %cst_33 = arith.constant dense<0.000000e+00> : vector<16x256xf32>
    %46 = tpu.matmul %44, %45, %cst_33 {dimension_numbers = #tpu.dot_dimension_numbers<[1], [0], [0], [1], [0, 0, 1, 1], [], []>} : vector<16x128xf32>, vector<128x256xf32>, vector<16x256xf32> -> vector<16x256xf32>
    %47 = vector.extract_strided_slice %46 {offsets = [0, 128], sizes = [16, 128], strides = [1, 1]} : vector<16x256xf32> to vector<16x128xf32>
    %c15_i32 = arith.constant 15 : i32
    %48 = tpu.dynamic_rotate %47 by %c15_i32 dim 0 : vector<16x128xf32>, i32 -> vector<16x128xf32>
    %49 = vector.extract_strided_slice %46 {offsets = [0, 0], sizes = [16, 128], strides = [1, 1]} : vector<16x256xf32> to vector<16x128xf32>
    %50 = arith.addf %49, %48 : vector<16x128xf32>
    %c0_34 = arith.constant 0 : index
    %c0_35 = arith.constant 0 : index
    %51 = vector.load %arg13[%c0_34, %c0_35] : memref<1x128xf32, #tpu.memory_space<vmem>>, vector<1x128xf32>
    %52 = vector.broadcast %51 : vector<1x128xf32> to vector<16x128xf32>
    %53 = arith.addf %50, %52 : vector<16x128xf32>
    %cst_36 = arith.constant 0.000000e+00 : f32
    %54 = vector.broadcast %cst_36 : f32 to vector<16x128xf32>
    %55 = arith.maximumf %53, %54 : vector<16x128xf32>
    %c0_37 = arith.constant 0 : index
    %c0_38 = arith.constant 0 : index
    %56 = vector.load %arg14[%c0_37, %c0_38] : memref<128x128xf32, #tpu.memory_space<vmem>>, vector<128x128xf32>
    %cst_39 = arith.constant dense<0.000000e+00> : vector<16x128xf32>
    %57 = tpu.matmul %55, %56, %cst_39 {dimension_numbers = #tpu.dot_dimension_numbers<[1], [0], [0], [1], [0, 0, 1, 1], [], []>} : vector<16x128xf32>, vector<128x128xf32>, vector<16x128xf32> -> vector<16x128xf32>
    %c0_40 = arith.constant 0 : index
    %c0_41 = arith.constant 0 : index
    %58 = vector.load %arg15[%c0_40, %c0_41] : memref<1x128xf32, #tpu.memory_space<vmem>>, vector<1x128xf32>
    %59 = vector.broadcast %58 : vector<1x128xf32> to vector<16x128xf32>
    %60 = arith.addf %57, %59 : vector<16x128xf32>
    %61 = arith.addf %60, %53 : vector<16x128xf32>
    %cst_42 = arith.constant 0.000000e+00 : f32
    %62 = vector.broadcast %cst_42 : f32 to vector<16x128xf32>
    %63 = arith.maximumf %61, %62 : vector<16x128xf32>
    %c0_43 = arith.constant 0 : index
    %c0_44 = arith.constant 0 : index
    %64 = vector.load %arg16[%c0_43, %c0_44] : memref<128x128xf32, #tpu.memory_space<vmem>>, vector<128x128xf32>
    %cst_45 = arith.constant dense<0.000000e+00> : vector<16x128xf32>
    %65 = tpu.matmul %63, %64, %cst_45 {dimension_numbers = #tpu.dot_dimension_numbers<[1], [0], [0], [1], [0, 0, 1, 1], [], []>} : vector<16x128xf32>, vector<128x128xf32>, vector<16x128xf32> -> vector<16x128xf32>
    %c0_46 = arith.constant 0 : index
    %c0_47 = arith.constant 0 : index
    %66 = vector.load %arg17[%c0_46, %c0_47] : memref<1x128xf32, #tpu.memory_space<vmem>>, vector<1x128xf32>
    %67 = vector.broadcast %66 : vector<1x128xf32> to vector<16x128xf32>
    %68 = arith.addf %65, %67 : vector<16x128xf32>
    %69 = vector.extract_strided_slice %68 {offsets = [0, 0], sizes = [9, 128], strides = [1, 1]} : vector<16x128xf32> to vector<9x128xf32>
    %c0_48 = arith.constant 0 : index
    %c0_49 = arith.constant 0 : index
    %c0_50 = arith.constant 0 : index
    %70 = vector.load %arg18[%c0_48, %c0_49, %c0_50] : memref<1x9x128xf32, #tpu.memory_space<vmem>>, vector<1x9x128xf32>
    %71 = vector.shape_cast %70 : vector<1x9x128xf32> to vector<9x128xf32>
    %72 = vector.shape_cast %69 : vector<9x128xf32> to vector<1x9x128xf32>
    tpu.vector_store %arg18[%c0_48, %c0_49, %c0_50], %72 {strides = array<i32>} : memref<1x9x128xf32, #tpu.memory_space<vmem>>, vector<1x9x128xf32>,
    return
  }
  func.func @transform_0(%arg0: i32) -> (i32, i32, i32) {
    %c0_i32 = arith.constant 0 : i32
    %c0_i32_0 = arith.constant 0 : i32
    %c0_i32_1 = arith.constant 0 : i32
    return %arg0, %c0_i32, %c0_i32_0 : i32, i32, i32
  }
  func.func @transform_1(%arg0: i32) -> (i32, i32, i32) {
    %c0_i32 = arith.constant 0 : i32
    %c0_i32_0 = arith.constant 0 : i32
    %c0_i32_1 = arith.constant 0 : i32
    return %arg0, %c0_i32, %c0_i32_0 : i32, i32, i32
  }
  func.func @transform_2(%arg0: i32) -> (i32, i32) {
    %c0_i32 = arith.constant 0 : i32
    %c0_i32_0 = arith.constant 0 : i32
    %c0_i32_1 = arith.constant 0 : i32
    return %c0_i32, %c0_i32_0 : i32, i32
  }
  func.func @transform_3(%arg0: i32) -> (i32, i32) {
    %c0_i32 = arith.constant 0 : i32
    %c0_i32_0 = arith.constant 0 : i32
    %c0_i32_1 = arith.constant 0 : i32
    return %c0_i32, %c0_i32_0 : i32, i32
  }
  func.func @transform_4(%arg0: i32) -> (i32, i32) {
    %c0_i32 = arith.constant 0 : i32
    %c0_i32_0 = arith.constant 0 : i32
    %c0_i32_1 = arith.constant 0 : i32
    return %c0_i32, %c0_i32_0 : i32, i32
  }
  func.func @transform_5(%arg0: i32) -> (i32, i32) {
    %c0_i32 = arith.constant 0 : i32
    %c0_i32_0 = arith.constant 0 : i32
    %c0_i32_1 = arith.constant 0 : i32
    return %c0_i32, %c0_i32_0 : i32, i32
  }
  func.func @transform_6(%arg0: i32) -> (i32, i32) {
    %c0_i32 = arith.constant 0 : i32
    %c0_i32_0 = arith.constant 0 : i32
    %c0_i32_1 = arith.constant 0 : i32
    return %c0_i32, %c0_i32_0 : i32, i32
  }
  func.func @transform_7(%arg0: i32) -> (i32, i32) {
    %c0_i32 = arith.constant 0 : i32
    %c0_i32_0 = arith.constant 0 : i32
    %c0_i32_1 = arith.constant 0 : i32
    return %c0_i32, %c0_i32_0 : i32, i32
  }
  func.func @transform_8(%arg0: i32) -> (i32, i32) {
    %c0_i32 = arith.constant 0 : i32
    %c0_i32_0 = arith.constant 0 : i32
    %c0_i32_1 = arith.constant 0 : i32
    return %c0_i32, %c0_i32_0 : i32, i32
  }
  func.func @transform_9(%arg0: i32) -> (i32, i32) {
    %c0_i32 = arith.constant 0 : i32
    %c0_i32_0 = arith.constant 0 : i32
    %c0_i32_1 = arith.constant 0 : i32
    return %c0_i32, %c0_i32_0 : i32, i32
  }
  func.func @transform_10(%arg0: i32) -> (i32, i32) {
    %c0_i32 = arith.constant 0 : i32
    %c0_i32_0 = arith.constant 0 : i32
    %c0_i32_1 = arith.constant 0 : i32
    return %c0_i32, %c0_i32_0 : i32, i32
  }
  func.func @transform_11(%arg0: i32) -> (i32, i32) {
    %c0_i32 = arith.constant 0 : i32
    %c0_i32_0 = arith.constant 0 : i32
    %c0_i32_1 = arith.constant 0 : i32
    return %c0_i32, %c0_i32_0 : i32, i32
  }
  func.func @transform_12(%arg0: i32) -> (i32, i32) {
    %c0_i32 = arith.constant 0 : i32
    %c0_i32_0 = arith.constant 0 : i32
    %c0_i32_1 = arith.constant 0 : i32
    return %c0_i32, %c0_i32_0 : i32, i32
  }
  func.func @transform_13(%arg0: i32) -> (i32, i32) {
    %c0_i32 = arith.constant 0 : i32
    %c0_i32_0 = arith.constant 0 : i32
    %c0_i32_1 = arith.constant 0 : i32
    return %c0_i32, %c0_i32_0 : i32, i32
  }
  func.func @transform_14(%arg0: i32) -> (i32, i32) {
    %c0_i32 = arith.constant 0 : i32
    %c0_i32_0 = arith.constant 0 : i32
    %c0_i32_1 = arith.constant 0 : i32
    return %c0_i32, %c0_i32_0 : i32, i32
  }
  func.func @transform_15(%arg0: i32) -> (i32, i32) {
    %c0_i32 = arith.constant 0 : i32
    %c0_i32_0 = arith.constant 0 : i32
    %c0_i32_1 = arith.constant 0 : i32
    return %c0_i32, %c0_i32_0 : i32, i32
  }
  func.func @transform_16(%arg0: i32) -> (i32, i32) {
    %c0_i32 = arith.constant 0 : i32
    %c0_i32_0 = arith.constant 0 : i32
    %c0_i32_1 = arith.constant 0 : i32
    return %c0_i32, %c0_i32_0 : i32, i32
  }
  func.func @transform_17(%arg0: i32) -> (i32, i32, i32) {
    %c0_i32 = arith.constant 0 : i32
    %c0_i32_0 = arith.constant 0 : i32
    %c0_i32_1 = arith.constant 0 : i32
    return %arg0, %c0_i32, %c0_i32_0 : i32, i32, i32
  }
}

</mosaic_0001>

<llo_original>
// kernel: subband_fftnet_forward.1
$region0: #{subband_fftnet_forward.1}
  #allocation0 [shape = 'u32[]', space=smem, size = 0x4, offset = 0x4, fixed_abs, tag = 'smem constant byte address 0x4 - core index']
  #allocation1 [shape = 'u32[144,128]{1,0:T(1,128)}', space=vmem, size = 0x12000, scoped, tag = 'internal scratch']
  %s0 = inlined_call_operand.vmem [shape: f32[2,16,4], index: 0, kind: input, shape index: {}]
  %s1 = inlined_call_operand.vmem [shape: f32[2,16,8], index: 1, kind: input, shape index: {}]
  %s2 = inlined_call_operand.vmem [shape: f32[4,256], index: 2, kind: input, shape index: {}]
  %s3 = inlined_call_operand.vmem [shape: f32[8,256], index: 3, kind: input, shape index: {}]
  %s4 = inlined_call_operand.vmem [shape: f32[1,128], index: 4, kind: input, shape index: {}]
  %s5 = inlined_call_operand.hbm [shape: f32[128,128], index: 5, kind: input, shape index: {}]
  %s6 = inlined_call_operand.vmem [shape: f32[1,128], index: 6, kind: input, shape index: {}]
  %s7 = inlined_call_operand.hbm [shape: f32[128,256], index: 7, kind: input, shape index: {}]
  %s8 = inlined_call_operand.vmem [shape: f32[1,128], index: 8, kind: input, shape index: {}]
  %s9 = inlined_call_operand.hbm [shape: f32[128,128], index: 9, kind: input, shape index: {}]
  %s10 = inlined_call_operand.vmem [shape: f32[1,128], index: 10, kind: input, shape index: {}]
  %s11 = inlined_call_operand.hbm [shape: f32[128,256], index: 11, kind: input, shape index: {}]
  %s12 = inlined_call_operand.vmem [shape: f32[1,128], index: 12, kind: input, shape index: {}]
  %s13 = inlined_call_operand.hbm [shape: f32[128,128], index: 13, kind: input, shape index: {}]
  %s14 = inlined_call_operand.vmem [shape: f32[1,128], index: 14, kind: input, shape index: {}]
  %s15 = inlined_call_operand.vmem [shape: f32[128,128], index: 15, kind: input, shape index: {}]
  %s16 = inlined_call_operand.vmem [shape: f32[1,128], index: 16, kind: input, shape index: {}]
  %s17 = inlined_call_operand.vmem [shape: f32[2,9,128], index: 17, kind: output, shape index: {}]
  %s18 = sld [smem:[#allocation0]]
  $region121: #{subband_fftnet_forward.1} parent=0
    _
  %s20 = ssub.s32 1, %s18
  %s21 = scalar_select 0, %s20, %s18
  $region1: #{subband_fftnet_forward.1} parent=0
    #allocation2 [shape = 'u8[65536]{0}', space=vmem, size = 0x10000, scoped, tag = 'input window, operand 5, single buffered']
    #allocation3 [shape = 's32[2]{0}', space=sflag, size = 0x8, scoped, tag = 'scoped memory for subband_fftnet_forward.1']
    #allocation4 [shape = 'u8[131072]{0}', space=vmem, size = 0x20000, scoped, tag = 'input window, operand 7, single buffered']
    #allocation5 [shape = 's32[1]{0}', space=sflag, size = 0x4, scoped, tag = 'scoped memory for subband_fftnet_forward.1']
    #allocation6 [shape = 'u8[65536]{0}', space=vmem, size = 0x10000, scoped, tag = 'input window, operand 9, single buffered']
    #allocation7 [shape = 'u8[131072]{0}', space=vmem, size = 0x20000, scoped, tag = 'input window, operand 11, single buffered']
    #allocation8 [shape = 's32[1]{0}', space=sflag, size = 0x4, scoped, tag = 'scoped memory for subband_fftnet_forward.1']
    #allocation9 [shape = 'u8[65536]{0}', space=vmem, size = 0x10000, scoped, tag = 'input window, operand 13, single buffered']
    %22 = vsyncpa [#allocation3], 0
    %23 = vsyncpa [#allocation5], 0
    %24 = vsyncpa [#allocation8], 0
    loop: start=0, step=1, limit=4
    $region2: #{subband_fftnet_forward.1} parent=1 // loop_pre_header
      _
    $region3: #{subband_fftnet_forward.1} parent=1 // loop_header
      %s26 = sphi 0, %s30
      %p27 = scmp.ge.s32.totalorder %s26, 4
      %s36 = sphi 0, %s38
      %s39 = sphi 0, %s36
      %s40 = sphi 0, %s39
      %s56 = sphi 0, %s40
      %s62 = sphi 0, %s64
      %s65 = sphi 0, %s62
      %s66 = sphi 0, %s65
      %s82 = sphi 0, %s66
      %s86 = sphi 0, %s86
      %s88 = sphi 0, %s86
      %s89 = sphi 0, %s88
      %s103 = sphi 0, %s89
      %s107 = sphi 0, %s107
      %s109 = sphi 0, %s107
      %s110 = sphi 0, %s109
      %s124 = sphi 0, %s110
      %s128 = sphi 0, %s128
      %s130 = sphi 0, %s128
      %s131 = sphi 0, %s130
      %s145 = sphi 0, %s131
      %s149 = sphi 0, %s149
      %s151 = sphi 0, %s149
      %s152 = sphi 0, %s151
      %s166 = sphi 0, %s152
      %s170 = sphi 0, %s170
      %s172 = sphi 0, %s170
      %s173 = sphi 0, %s172
      %s187 = sphi 0, %s173
      %s191 = sphi 0, %s191
      %s193 = sphi 0, %s191
      %s194 = sphi 0, %s193
      %s208 = sphi 0, %s194
      %s212 = sphi 0, %s212
      %s214 = sphi 0, %s212
      %s215 = sphi 0, %s214
      %s229 = sphi 0, %s215
      %s233 = sphi 0, %s233
      %s235 = sphi 0, %s233
      %s236 = sphi 0, %s235
      %s250 = sphi 0, %s236
      %s254 = sphi 0, %s254
      %s256 = sphi 0, %s254
      %s257 = sphi 0, %s256
      %s271 = sphi 0, %s257
      %s275 = sphi 0, %s275
      %s277 = sphi 0, %s275
      %s278 = sphi 0, %s277
      %s292 = sphi 0, %s278
      %s296 = sphi 0, %s296
      %s298 = sphi 0, %s296
      %s299 = sphi 0, %s298
      %s313 = sphi 0, %s299
      %s317 = sphi 0, %s317
      %s319 = sphi 0, %s317
      %s320 = sphi 0, %s319
      %s334 = sphi 0, %s320
      %s338 = sphi 0, %s338
      %s340 = sphi 0, %s338
      %s341 = sphi 0, %s340
      %s355 = sphi 0, %s341
      %s359 = sphi 0, %s359
      %s361 = sphi 0, %s359
      %s362 = sphi 0, %s361
      %s376 = sphi 0, %s362
      %s380 = sphi 0, %s380
      %s382 = sphi 0, %s380
      %s383 = sphi 0, %s382
      %s397 = sphi 0, %s383
      %s403 = sphi 0, %s405
      %s406 = sphi 0, %s403
      %s407 = sphi 0, %s406
      %s423 = sphi 0, %s407
    $region4: #{subband_fftnet_forward.1} parent=1 // loop_header_branch
      %29 = sbr.rel (%p27) target = $region8
    $region5: #{subband_fftnet_forward.1} parent=1 // loop_body
      %s31 = ssub.s32 %s26, 1
      %s32 = ssub.s32 %s26, 2
      %s33 = sadd.s32 %s26, 1
      %s34 = ssub.s32 %s26, %s33
      %p35 = scmp.eq.s32.totalorder %s34, 0
      %s37 = sadd.s32 %s36, 1
      %s38 = scalar_select %p35, %s36, %s37
      %p41 = pneg %p35
      %p42 = scmp.eq.s32.totalorder %s26, 1
      %p43 = por %p41, %p42
      %p44 = scmp.ne.s32.totalorder %s36, %s39
      %p45 = scmp.eq.s32.totalorder %s26, 0
      %p46 = por %p44, %p45
      %p47 = scmp.ne.s32.totalorder %s36, %s39
      %p48 = scmp.eq.s32.totalorder %s31, 1
      %p49 = por %p47, %p48
      %p50 = scmp.ne.s32.totalorder %s39, %s40
      %p51 = scmp.eq.s32.totalorder %s31, 0
      %p52 = por %p50, %p51
      %p53 = scmp.ne.s32.totalorder %s39, %s40
      %p54 = scmp.eq.s32.totalorder %s32, 1
      %p55 = por %p53, %p54
      %p57 = scmp.ne.s32.totalorder %s40, %s56
      %p58 = scmp.eq.s32.totalorder %s32, 0
      %p59 = por %p57, %p58
      %s60 = ssub.s32 %s26, %s33
      %p61 = scmp.eq.s32.totalorder %s60, 0
      %s63 = sadd.s32 %s62, 1
      %s64 = scalar_select %p61, %s62, %s63
      %p67 = pneg %p61
      %p68 = scmp.eq.s32.totalorder %s26, 1
      %p69 = por %p67, %p68
      %p70 = scmp.ne.s32.totalorder %s62, %s65
      %p71 = scmp.eq.s32.totalorder %s26, 0
      %p72 = por %p70, %p71
      %p73 = scmp.ne.s32.totalorder %s62, %s65
      %p74 = scmp.eq.s32.totalorder %s31, 1
      %p75 = por %p73, %p74
      %p76 = scmp.ne.s32.totalorder %s65, %s66
      %p77 = scmp.eq.s32.totalorder %s31, 0
      %p78 = por %p76, %p77
      %p79 = scmp.ne.s32.totalorder %s65, %s66
      %p80 = scmp.eq.s32.totalorder %s32, 1
      %p81 = por %p79, %p80
      %p83 = scmp.ne.s32.totalorder %s66, %s82
      %p84 = scmp.eq.s32.totalorder %s32, 0
      %p85 = por %p83, %p84
      %s87 = sadd.s32 %s86, 1
      %p90 = scmp.eq.s32.totalorder %s26, 1
      %p91 = scmp.ne.s32.totalorder %s86, %s88
      %p92 = scmp.eq.s32.totalorder %s26, 0
      %p93 = por %p91, %p92
      %p94 = scmp.ne.s32.totalorder %s86, %s88
      %p95 = scmp.eq.s32.totalorder %s31, 1
      %p96 = por %p94, %p95
      %p97 = scmp.ne.s32.totalorder %s88, %s89
      %p98 = scmp.eq.s32.totalorder %s31, 0
      %p99 = por %p97, %p98
      %p100 = scmp.ne.s32.totalorder %s88, %s89
      %p101 = scmp.eq.s32.totalorder %s32, 1
      %p102 = por %p100, %p101
      %p104 = scmp.ne.s32.totalorder %s89, %s103
      %p105 = scmp.eq.s32.totalorder %s32, 0
      %p106 = por %p104, %p105
      %s108 = sadd.s32 %s107, 1
      %p111 = scmp.eq.s32.totalorder %s26, 1
      %p112 = scmp.ne.s32.totalorder %s107, %s109
      %p113 = scmp.eq.s32.totalorder %s26, 0
      %p114 = por %p112, %p113
      %p115 = scmp.ne.s32.totalorder %s107, %s109
      %p116 = scmp.eq.s32.totalorder %s31, 1
      %p117 = por %p115, %p116
      %p118 = scmp.ne.s32.totalorder %s109, %s110
      %p119 = scmp.eq.s32.totalorder %s31, 0
      %p120 = por %p118, %p119
      %p121 = scmp.ne.s32.totalorder %s109, %s110
      %p122 = scmp.eq.s32.totalorder %s32, 1
      %p123 = por %p121, %p122
      %p125 = scmp.ne.s32.totalorder %s110, %s124
      %p126 = scmp.eq.s32.totalorder %s32, 0
      %p127 = por %p125, %p126
      %s129 = sadd.s32 %s128, 1
      %p132 = scmp.eq.s32.totalorder %s26, 1
      %p133 = scmp.ne.s32.totalorder %s128, %s130
      %p134 = scmp.eq.s32.totalorder %s26, 0
      %p135 = por %p133, %p134
      %p136 = scmp.ne.s32.totalorder %s128, %s130
      %p137 = scmp.eq.s32.totalorder %s31, 1
      %p138 = por %p136, %p137
      %p139 = scmp.ne.s32.totalorder %s130, %s131
      %p140 = scmp.eq.s32.totalorder %s31, 0
      %p141 = por %p139, %p140
      %p142 = scmp.ne.s32.totalorder %s130, %s131
      %p143 = scmp.eq.s32.totalorder %s32, 1
      %p144 = por %p142, %p143
      %p146 = scmp.ne.s32.totalorder %s131, %s145
      %p147 = scmp.eq.s32.totalorder %s32, 0
      %p148 = por %p146, %p147
      %s150 = sadd.s32 %s149, 1
      %p153 = scmp.eq.s32.totalorder %s26, 1
      %p154 = scmp.ne.s32.totalorder %s149, %s151
      %p155 = scmp.eq.s32.totalorder %s26, 0
      %p156 = por %p154, %p155
      %p157 = scmp.ne.s32.totalorder %s149, %s151
      %p158 = scmp.eq.s32.totalorder %s31, 1
      %p159 = por %p157, %p158
      %p160 = scmp.ne.s32.totalorder %s151, %s152
      %p161 = scmp.eq.s32.totalorder %s31, 0
      %p162 = por %p160, %p161
      %p163 = scmp.ne.s32.totalorder %s151, %s152
      %p164 = scmp.eq.s32.totalorder %s32, 1
      %p165 = por %p163, %p164
      %p167 = scmp.ne.s32.totalorder %s152, %s166
      %p168 = scmp.eq.s32.totalorder %s32, 0
      %p169 = por %p167, %p168
      %s171 = sadd.s32 %s170, 1
      %p174 = scmp.eq.s32.totalorder %s26, 1
      %p175 = scmp.ne.s32.totalorder %s170, %s172
      %p176 = scmp.eq.s32.totalorder %s26, 0
      %p177 = por %p175, %p176
      %p178 = scmp.ne.s32.totalorder %s170, %s172
      %p179 = scmp.eq.s32.totalorder %s31, 1
      %p180 = por %p178, %p179
      %p181 = scmp.ne.s32.totalorder %s172, %s173
      %p182 = scmp.eq.s32.totalorder %s31, 0
      %p183 = por %p181, %p182
      %p184 = scmp.ne.s32.totalorder %s172, %s173
      %p185 = scmp.eq.s32.totalorder %s32, 1
      %p186 = por %p184, %p185
      %p188 = scmp.ne.s32.totalorder %s173, %s187
      %p189 = scmp.eq.s32.totalorder %s32, 0
      %p190 = por %p188, %p189
      %s192 = sadd.s32 %s191, 1
      %p195 = scmp.eq.s32.totalorder %s26, 1
      %p196 = scmp.ne.s32.totalorder %s191, %s193
      %p197 = scmp.eq.s32.totalorder %s26, 0
      %p198 = por %p196, %p197
      %p199 = scmp.ne.s32.totalorder %s191, %s193
      %p200 = scmp.eq.s32.totalorder %s31, 1
      %p201 = por %p199, %p200
      %p202 = scmp.ne.s32.totalorder %s193, %s194
      %p203 = scmp.eq.s32.totalorder %s31, 0
      %p204 = por %p202, %p203
      %p205 = scmp.ne.s32.totalorder %s193, %s194
      %p206 = scmp.eq.s32.totalorder %s32, 1
      %p207 = por %p205, %p206
      %p209 = scmp.ne.s32.totalorder %s194, %s208
      %p210 = scmp.eq.s32.totalorder %s32, 0
      %p211 = por %p209, %p210
      %s213 = sadd.s32 %s212, 1
      %p216 = scmp.eq.s32.totalorder %s26, 1
      %p217 = scmp.ne.s32.totalorder %s212, %s214
      %p218 = scmp.eq.s32.totalorder %s26, 0
      %p219 = por %p217, %p218
      %p220 = scmp.ne.s32.totalorder %s212, %s214
      %p221 = scmp.eq.s32.totalorder %s31, 1
      %p222 = por %p220, %p221
      %p223 = scmp.ne.s32.totalorder %s214, %s215
      %p224 = scmp.eq.s32.totalorder %s31, 0
      %p225 = por %p223, %p224
      %p226 = scmp.ne.s32.totalorder %s214, %s215
      %p227 = scmp.eq.s32.totalorder %s32, 1
      %p228 = por %p226, %p227
      %p230 = scmp.ne.s32.totalorder %s215, %s229
      %p231 = scmp.eq.s32.totalorder %s32, 0
      %p232 = por %p230, %p231
      %s234 = sadd.s32 %s233, 1
      %p237 = scmp.eq.s32.totalorder %s26, 1
      %p238 = scmp.ne.s32.totalorder %s233, %s235
      %p239 = scmp.eq.s32.totalorder %s26, 0
      %p240 = por %p238, %p239
      %p241 = scmp.ne.s32.totalorder %s233, %s235
      %p242 = scmp.eq.s32.totalorder %s31, 1
      %p243 = por %p241, %p242
      %p244 = scmp.ne.s32.totalorder %s235, %s236
      %p245 = scmp.eq.s32.totalorder %s31, 0
      %p246 = por %p244, %p245
      %p247 = scmp.ne.s32.totalorder %s235, %s236
      %p248 = scmp.eq.s32.totalorder %s32, 1
      %p249 = por %p247, %p248
      %p251 = scmp.ne.s32.totalorder %s236, %s250
      %p252 = scmp.eq.s32.totalorder %s32, 0
      %p253 = por %p251, %p252
      %s255 = sadd.s32 %s254, 1
      %p258 = scmp.eq.s32.totalorder %s26, 1
      %p259 = scmp.ne.s32.totalorder %s254, %s256
      %p260 = scmp.eq.s32.totalorder %s26, 0
      %p261 = por %p259, %p260
      %p262 = scmp.ne.s32.totalorder %s254, %s256
      %p263 = scmp.eq.s32.totalorder %s31, 1
      %p264 = por %p262, %p263
      %p265 = scmp.ne.s32.totalorder %s256, %s257
      %p266 = scmp.eq.s32.totalorder %s31, 0
      %p267 = por %p265, %p266
      %p268 = scmp.ne.s32.totalorder %s256, %s257
      %p269 = scmp.eq.s32.totalorder %s32, 1
      %p270 = por %p268, %p269
      %p272 = scmp.ne.s32.totalorder %s257, %s271
      %p273 = scmp.eq.s32.totalorder %s32, 0
      %p274 = por %p272, %p273
      %s276 = sadd.s32 %s275, 1
      %p279 = scmp.eq.s32.totalorder %s26, 1
      %p280 = scmp.ne.s32.totalorder %s275, %s277
      %p281 = scmp.eq.s32.totalorder %s26, 0
      %p282 = por %p280, %p281
      %p283 = scmp.ne.s32.totalorder %s275, %s277
      %p284 = scmp.eq.s32.totalorder %s31, 1
      %p285 = por %p283, %p284
      %p286 = scmp.ne.s32.totalorder %s277, %s278
      %p287 = scmp.eq.s32.totalorder %s31, 0
      %p288 = por %p286, %p287
      %p289 = scmp.ne.s32.totalorder %s277, %s278
      %p290 = scmp.eq.s32.totalorder %s32, 1
      %p291 = por %p289, %p290
      %p293 = scmp.ne.s32.totalorder %s278, %s292
      %p294 = scmp.eq.s32.totalorder %s32, 0
      %p295 = por %p293, %p294
      %s297 = sadd.s32 %s296, 1
      %p300 = scmp.eq.s32.totalorder %s26, 1
      %p301 = scmp.ne.s32.totalorder %s296, %s298
      %p302 = scmp.eq.s32.totalorder %s26, 0
      %p303 = por %p301, %p302
      %p304 = scmp.ne.s32.totalorder %s296, %s298
      %p305 = scmp.eq.s32.totalorder %s31, 1
      %p306 = por %p304, %p305
      %p307 = scmp.ne.s32.totalorder %s298, %s299
      %p308 = scmp.eq.s32.totalorder %s31, 0
      %p309 = por %p307, %p308
      %p310 = scmp.ne.s32.totalorder %s298, %s299
      %p311 = scmp.eq.s32.totalorder %s32, 1
      %p312 = por %p310, %p311
      %p314 = scmp.ne.s32.totalorder %s299, %s313
      %p315 = scmp.eq.s32.totalorder %s32, 0
      %p316 = por %p314, %p315
      %s318 = sadd.s32 %s317, 1
      %p321 = scmp.eq.s32.totalorder %s26, 1
      %p322 = scmp.ne.s32.totalorder %s317, %s319
      %p323 = scmp.eq.s32.totalorder %s26, 0
      %p324 = por %p322, %p323
      %p325 = scmp.ne.s32.totalorder %s317, %s319
      %p326 = scmp.eq.s32.totalorder %s31, 1
      %p327 = por %p325, %p326
      %p328 = scmp.ne.s32.totalorder %s319, %s320
      %p329 = scmp.eq.s32.totalorder %s31, 0
      %p330 = por %p328, %p329
      %p331 = scmp.ne.s32.totalorder %s319, %s320
      %p332 = scmp.eq.s32.totalorder %s32, 1
      %p333 = por %p331, %p332
      %p335 = scmp.ne.s32.totalorder %s320, %s334
      %p336 = scmp.eq.s32.totalorder %s32, 0
      %p337 = por %p335, %p336
      %s339 = sadd.s32 %s338, 1
      %p342 = scmp.eq.s32.totalorder %s26, 1
      %p343 = scmp.ne.s32.totalorder %s338, %s340
      %p344 = scmp.eq.s32.totalorder %s26, 0
      %p345 = por %p343, %p344
      %p346 = scmp.ne.s32.totalorder %s338, %s340
      %p347 = scmp.eq.s32.totalorder %s31, 1
      %p348 = por %p346, %p347
      %p349 = scmp.ne.s32.totalorder %s340, %s341
      %p350 = scmp.eq.s32.totalorder %s31, 0
      %p351 = por %p349, %p350
      %p352 = scmp.ne.s32.totalorder %s340, %s341
      %p353 = scmp.eq.s32.totalorder %s32, 1
      %p354 = por %p352, %p353
      %p356 = scmp.ne.s32.totalorder %s341, %s355
      %p357 = scmp.eq.s32.totalorder %s32, 0
      %p358 = por %p356, %p357
      %s360 = sadd.s32 %s359, 1
      %p363 = scmp.eq.s32.totalorder %s26, 1
      %p364 = scmp.ne.s32.totalorder %s359, %s361
      %p365 = scmp.eq.s32.totalorder %s26, 0
      %p366 = por %p364, %p365
      %p367 = scmp.ne.s32.totalorder %s359, %s361
      %p368 = scmp.eq.s32.totalorder %s31, 1
      %p369 = por %p367, %p368
      %p370 = scmp.ne.s32.totalorder %s361, %s362
      %p371 = scmp.eq.s32.totalorder %s31, 0
      %p372 = por %p370, %p371
      %p373 = scmp.ne.s32.totalorder %s361, %s362
      %p374 = scmp.eq.s32.totalorder %s32, 1
      %p375 = por %p373, %p374
      %p377 = scmp.ne.s32.totalorder %s362, %s376
      %p378 = scmp.eq.s32.totalorder %s32, 0
      %p379 = por %p377, %p378
      %s381 = sadd.s32 %s380, 1
      %p384 = scmp.eq.s32.totalorder %s26, 1
      %p385 = scmp.ne.s32.totalorder %s380, %s382
      %p386 = scmp.eq.s32.totalorder %s26, 0
      %p387 = por %p385, %p386
      %p388 = scmp.ne.s32.totalorder %s380, %s382
      %p389 = scmp.eq.s32.totalorder %s31, 1
      %p390 = por %p388, %p389
      %p391 = scmp.ne.s32.totalorder %s382, %s383
      %p392 = scmp.eq.s32.totalorder %s31, 0
      %p393 = por %p391, %p392
      %p394 = scmp.ne.s32.totalorder %s382, %s383
      %p395 = scmp.eq.s32.totalorder %s32, 1
      %p396 = por %p394, %p395
      %p398 = scmp.ne.s32.totalorder %s383, %s397
      %p399 = scmp.eq.s32.totalorder %s32, 0
      %p400 = por %p398, %p399
      %s401 = ssub.s32 %s26, %s33
      %p402 = scmp.eq.s32.totalorder %s401, 0
      %s404 = sadd.s32 %s403, 1
      %s405 = scalar_select %p402, %s403, %s404
      %p408 = pneg %p402
      %p409 = scmp.eq.s32.totalorder %s26, 1
      %p410 = por %p408, %p409
      %p411 = scmp.ne.s32.totalorder %s403, %s406
      %p412 = scmp.eq.s32.totalorder %s26, 0
      %p413 = por %p411, %p412
      %p414 = scmp.ne.s32.totalorder %s403, %s406
      %p415 = scmp.eq.s32.totalorder %s31, 1
      %p416 = por %p414, %p415
      %p417 = scmp.ne.s32.totalorder %s406, %s407
      %p418 = scmp.eq.s32.totalorder %s31, 0
      %p419 = por %p417, %p418
      %p420 = scmp.ne.s32.totalorder %s406, %s407
      %p421 = scmp.eq.s32.totalorder %s32, 1
      %p422 = por %p420, %p421
      %p424 = scmp.ne.s32.totalorder %s407, %s423
      %p425 = scmp.eq.s32.totalorder %s32, 0
      %p426 = por %p424, %p425
      %p427 = scmp.le.s32.totalorder 1, %s26
      %p428 = scmp.lt.s32.totalorder %s26, 3
      %p429 = pnand %p427, %p428
      %p430 = pneg %p429
      // Predicated region
      $region9: #{subband_fftnet_forward.1} parent=5 // pred_check
        _
      $region10: #{subband_fftnet_forward.1} parent=5 // pred_check_branch
        %432 = sbr.rel (%p429) target = $region12
      $region11: #{subband_fftnet_forward.1} parent=5 // pred_region
        %s433 = ssub.s32 %s26, 1
        // Predicated region
        $region13: #{subband_fftnet_forward.1} parent=11 // pred_check
          %p434 = pneg %p99
        $region14: #{subband_fftnet_forward.1} parent=11 // pred_check_branch
          %436 = sbr.rel (%p434) target = $region16
        $region15: #{subband_fftnet_forward.1} parent=11 // pred_region
          _
        $region16: #{subband_fftnet_forward.1} parent=11 // pred_fallthru
          _
        // Predicated region
        $region17: #{subband_fftnet_forward.1} parent=11 // pred_check
          %p437 = pneg %p120
        $region18: #{subband_fftnet_forward.1} parent=11 // pred_check_branch
          %439 = sbr.rel (%p437) target = $region20
        $region19: #{subband_fftnet_forward.1} parent=11 // pred_region
          _
        $region20: #{subband_fftnet_forward.1} parent=11 // pred_fallthru
          _
        // Predicated region
        $region21: #{subband_fftnet_forward.1} parent=11 // pred_check
          %p440 = pneg %p141
        $region22: #{subband_fftnet_forward.1} parent=11 // pred_check_branch
          %442 = sbr.rel (%p440) target = $region24
        $region23: #{subband_fftnet_forward.1} parent=11 // pred_region
          _
        $region24: #{subband_fftnet_forward.1} parent=11 // pred_fallthru
          _
        // Predicated region
        $region25: #{subband_fftnet_forward.1} parent=11 // pred_check
          %p443 = pneg %p162
        $region26: #{subband_fftnet_forward.1} parent=11 // pred_check_branch
          %445 = sbr.rel (%p443) target = $region28
        $region27: #{subband_fftnet_forward.1} parent=11 // pred_region
          %s447 = ssub.s32 2048, 2048
          %448 = vsyncadd [#allocation3], %s447
          %s449 = sshll.u32 [#allocation2], 4
          %s450 = int_to_ptr.vmem [resolvable:$true] %s449
          %455 = dma.hbm_to_vmem [thread:$0]  %s5, 2048, %s450, [#allocation3], 128, 128, 8
        $region28: #{subband_fftnet_forward.1} parent=11 // pred_fallthru
          _
        // Predicated region
        $region29: #{subband_fftnet_forward.1} parent=11 // pred_check
          %p456 = pneg %p183
        $region30: #{subband_fftnet_forward.1} parent=11 // pred_check_branch
          %458 = sbr.rel (%p456) target = $region32
        $region31: #{subband_fftnet_forward.1} parent=11 // pred_region
          _
        $region32: #{subband_fftnet_forward.1} parent=11 // pred_fallthru
          _
        // Predicated region
        $region33: #{subband_fftnet_forward.1} parent=11 // pred_check
          %p459 = pneg %p204
        $region34: #{subband_fftnet_forward.1} parent=11 // pred_check_branch
          %461 = sbr.rel (%p459) target = $region36
        $region35: #{subband_fftnet_forward.1} parent=11 // pred_region
          %s463 = ssub.s32 4096, 4096
          %464 = vsyncadd [#allocation5], %s463
          %s465 = sshll.u32 [#allocation4], 4
          %s466 = int_to_ptr.vmem [resolvable:$true] %s465
          %471 = dma.hbm_to_vmem [thread:$0]  %s7, 4096, %s466, [#allocation5], 256, 256, 16
        $region36: #{subband_fftnet_forward.1} parent=11 // pred_fallthru
          _
        // Predicated region
        $region37: #{subband_fftnet_forward.1} parent=11 // pred_check
          %p472 = pneg %p225
        $region38: #{subband_fftnet_forward.1} parent=11 // pred_check_branch
          %474 = sbr.rel (%p472) target = $region40
        $region39: #{subband_fftnet_forward.1} parent=11 // pred_region
          _
        $region40: #{subband_fftnet_forward.1} parent=11 // pred_fallthru
          _
        // Predicated region
        $region41: #{subband_fftnet_forward.1} parent=11 // pred_check
          %p475 = pneg %p246
        $region42: #{subband_fftnet_forward.1} parent=11 // pred_check_branch
          %477 = sbr.rel (%p475) target = $region44
        $region43: #{subband_fftnet_forward.1} parent=11 // pred_region
          %s479 = ssub.s32 2048, 2048
          %480 = vsyncadd [#allocation5], %s479
          %s481 = sshll.u32 [#allocation6], 4
          %s482 = int_to_ptr.vmem [resolvable:$true] %s481
          %487 = dma.hbm_to_vmem [thread:$0]  %s9, 2048, %s482, [#allocation5], 128, 128, 8
        $region44: #{subband_fftnet_forward.1} parent=11 // pred_fallthru
          _
        // Predicated region
        $region45: #{subband_fftnet_forward.1} parent=11 // pred_check
          %p488 = pneg %p267
        $region46: #{subband_fftnet_forward.1} parent=11 // pred_check_branch
          %490 = sbr.rel (%p488) target = $region48
        $region47: #{subband_fftnet_forward.1} parent=11 // pred_region
          _
        $region48: #{subband_fftnet_forward.1} parent=11 // pred_fallthru
          _
        // Predicated region
        $region49: #{subband_fftnet_forward.1} parent=11 // pred_check
          %p491 = pneg %p288
        $region50: #{subband_fftnet_forward.1} parent=11 // pred_check_branch
          %493 = sbr.rel (%p491) target = $region52
        $region51: #{subband_fftnet_forward.1} parent=11 // pred_region
          %s495 = ssub.s32 4096, 4096
          %496 = vsyncadd [#allocation8], %s495
          %s497 = sshll.u32 [#allocation7], 4
          %s498 = int_to_ptr.vmem [resolvable:$true] %s497
          %503 = dma.hbm_to_vmem [thread:$0]  %s11, 4096, %s498, [#allocation8], 256, 256, 16
        $region52: #{subband_fftnet_forward.1} parent=11 // pred_fallthru
          _
        // Predicated region
        $region53: #{subband_fftnet_forward.1} parent=11 // pred_check
          %p504 = pneg %p309
        $region54: #{subband_fftnet_forward.1} parent=11 // pred_check_branch
          %506 = sbr.rel (%p504) target = $region56
        $region55: #{subband_fftnet_forward.1} parent=11 // pred_region
          _
        $region56: #{subband_fftnet_forward.1} parent=11 // pred_fallthru
          _
        // Predicated region
        $region57: #{subband_fftnet_forward.1} parent=11 // pred_check
          %p507 = pneg %p330
        $region58: #{subband_fftnet_forward.1} parent=11 // pred_check_branch
          %509 = sbr.rel (%p507) target = $region60
        $region59: #{subband_fftnet_forward.1} parent=11 // pred_region
          %s511 = ssub.s32 2048, 2048
          %512 = vsyncadd [#allocation8], %s511
          %s513 = sshll.u32 [#allocation9], 4
          %s514 = int_to_ptr.vmem [resolvable:$true] %s513
          %519 = dma.hbm_to_vmem [thread:$0]  %s13, 2048, %s514, [#allocation8], 128, 128, 8
        $region60: #{subband_fftnet_forward.1} parent=11 // pred_fallthru
          _
        // Predicated region
        $region61: #{subband_fftnet_forward.1} parent=11 // pred_check
          %p520 = pneg %p351
        $region62: #{subband_fftnet_forward.1} parent=11 // pred_check_branch
          %522 = sbr.rel (%p520) target = $region64
        $region63: #{subband_fftnet_forward.1} parent=11 // pred_region
          _
        $region64: #{subband_fftnet_forward.1} parent=11 // pred_fallthru
          _
        // Predicated region
        $region65: #{subband_fftnet_forward.1} parent=11 // pred_check
          %p523 = pneg %p372
        $region66: #{subband_fftnet_forward.1} parent=11 // pred_check_branch
          %525 = sbr.rel (%p523) target = $region68
        $region67: #{subband_fftnet_forward.1} parent=11 // pred_region
          _
        $region68: #{subband_fftnet_forward.1} parent=11 // pred_fallthru
          _
        // Predicated region
        $region69: #{subband_fftnet_forward.1} parent=11 // pred_check
          %p526 = pneg %p393
        $region70: #{subband_fftnet_forward.1} parent=11 // pred_check_branch
          %528 = sbr.rel (%p526) target = $region72
        $region71: #{subband_fftnet_forward.1} parent=11 // pred_region
          _
        $region72: #{subband_fftnet_forward.1} parent=11 // pred_fallthru
          _
      $region12: #{subband_fftnet_forward.1} parent=5 // pred_fallthru
        _
      %p529 = scmp.lt.s32.totalorder %s26, 2
      // Predicated region
      $region73: #{subband_fftnet_forward.1} parent=5 // pred_check
        %p530 = pneg %p529
      $region74: #{subband_fftnet_forward.1} parent=5 // pred_check_branch
        %532 = sbr.rel (%p530) target = $region76
      $region75: #{subband_fftnet_forward.1} parent=5 // pred_region
        // Predicated region
        $region77: #{subband_fftnet_forward.1} parent=75 // pred_check
          %p533 = pneg %p46
        $region78: #{subband_fftnet_forward.1} parent=75 // pred_check_branch
          %535 = sbr.rel (%p533) target = $region80
        $region79: #{subband_fftnet_forward.1} parent=75 // pred_region
          %p536 = scmp.lt.s32.totalorder %s26, 1
          %s537 = scalar_select %p536, %s26, 1
          %s538 = smul.addr %s537, 2
          %s539 = smul.addr %s538, 8
          %s540 = scalar_lea.vmem %s0, %s539
        $region80: #{subband_fftnet_forward.1} parent=75 // pred_fallthru
          _
        // Predicated region
        $region81: #{subband_fftnet_forward.1} parent=75 // pred_check
          %p541 = pneg %p72
        $region82: #{subband_fftnet_forward.1} parent=75 // pred_check_branch
          %543 = sbr.rel (%p541) target = $region84
        $region83: #{subband_fftnet_forward.1} parent=75 // pred_region
          %p544 = scmp.lt.s32.totalorder %s26, 1
          %s545 = scalar_select %p544, %s26, 1
          %s546 = smul.addr %s545, 2
          %s547 = smul.addr %s546, 8
          %s548 = scalar_lea.vmem %s1, %s547
        $region84: #{subband_fftnet_forward.1} parent=75 // pred_fallthru
          _
      $region76: #{subband_fftnet_forward.1} parent=5 // pred_fallthru
        _
      %p549 = scmp.le.s32.totalorder 1, %s26
      %p550 = scmp.lt.s32.totalorder %s26, 3
      %p551 = pnand %p549, %p550
      %p552 = pneg %p551
      // Predicated region
      $region85: #{subband_fftnet_forward.1} parent=5 // pred_check
        _
      $region86: #{subband_fftnet_forward.1} parent=5 // pred_check_branch
        %554 = sbr.rel (%p551) target = $region88
      $region87: #{subband_fftnet_forward.1} parent=5 // pred_region
        %s555 = ssub.s32 %s26, 1
        // Predicated region
        $region89: #{subband_fftnet_forward.1} parent=87 // pred_check
          %p556 = pneg %p162
        $region90: #{subband_fftnet_forward.1} parent=87 // pred_check_branch
          %558 = sbr.rel (%p556) target = $region92
        $region91: #{subband_fftnet_forward.1} parent=87 // pred_region
          %559 = dma.done [#allocation3], 2048
        $region92: #{subband_fftnet_forward.1} parent=87 // pred_fallthru
          _
        // Predicated region
        $region93: #{subband_fftnet_forward.1} parent=87 // pred_check
          %p560 = pneg %p204
        $region94: #{subband_fftnet_forward.1} parent=87 // pred_check_branch
          %562 = sbr.rel (%p560) target = $region96
        $region95: #{subband_fftnet_forward.1} parent=87 // pred_region
          %563 = dma.done [#allocation5], 4096
        $region96: #{subband_fftnet_forward.1} parent=87 // pred_fallthru
          _
        // Predicated region
        $region97: #{subband_fftnet_forward.1} parent=87 // pred_check
          %p564 = pneg %p246
        $region98: #{subband_fftnet_forward.1} parent=87 // pred_check_branch
          %566 = sbr.rel (%p564) target = $region100
        $region99: #{subband_fftnet_forward.1} parent=87 // pred_region
          %567 = dma.done [#allocation5], 2048
        $region100: #{subband_fftnet_forward.1} parent=87 // pred_fallthru
          _
        // Predicated region
        $region101: #{subband_fftnet_forward.1} parent=87 // pred_check
          %p568 = pneg %p288
        $region102: #{subband_fftnet_forward.1} parent=87 // pred_check_branch
          %570 = sbr.rel (%p568) target = $region104
        $region103: #{subband_fftnet_forward.1} parent=87 // pred_region
          %571 = dma.done [#allocation8], 4096
        $region104: #{subband_fftnet_forward.1} parent=87 // pred_fallthru
          _
        // Predicated region
        $region105: #{subband_fftnet_forward.1} parent=87 // pred_check
          %p572 = pneg %p330
        $region106: #{subband_fftnet_forward.1} parent=87 // pred_check_branch
          %574 = sbr.rel (%p572) target = $region108
        $region107: #{subband_fftnet_forward.1} parent=87 // pred_region
          %575 = dma.done [#allocation8], 2048
        $region108: #{subband_fftnet_forward.1} parent=87 // pred_fallthru
          _
        %p576 = scmp.lt.s32.totalorder %s31, 1
        %s577 = scalar_select %p576, %s31, 1
        %s578 = smul.addr %s577, 2
        %s579 = smul.addr %s578, 8
        %s580 = scalar_lea.vmem %s0, %s579
        %p581 = pneg %p52
        %p582 = pneg %p49
        %p583 = scmp.lt.s32.totalorder %s31, 1
        %s584 = scalar_select %p583, %s31, 1
        %s585 = smul.addr %s584, 2
        %s586 = smul.addr %s585, 8
        %s587 = scalar_lea.vmem %s1, %s586
        %p588 = pneg %p78
        %p589 = pneg %p75
        %p590 = pneg %p99
        %p591 = pneg %p96
        %p592 = pneg %p120
        %p593 = pneg %p117
        %p594 = pneg %p141
        %p595 = pneg %p138
        %p596 = pneg %p162
        %p597 = pneg %p159
        %p598 = pneg %p183
        %p599 = pneg %p180
        %p600 = pneg %p204
        %p601 = pneg %p201
        %p602 = pneg %p225
        %p603 = pneg %p222
        %p604 = pneg %p246
        %p605 = pneg %p243
        %p606 = pneg %p267
        %p607 = pneg %p264
        %p608 = pneg %p288
        %p609 = pneg %p285
        %p610 = pneg %p309
        %p611 = pneg %p306
        %p612 = pneg %p330
        %p613 = pneg %p327
        %p614 = pneg %p351
        %p615 = pneg %p348
        %p616 = pneg %p372
        %p617 = pneg %p369
        %p618 = pneg %p393
        %p619 = pneg %p390
        %p620 = pneg %p419
        %p621 = pneg %p416
        %p622 = scmp.lt.s32.totalorder %s31, 1
        %s623 = scalar_select %p622, %s31, 1
        %s624 = smul.addr %s623, 2
        %s625 = smul.addr %s624, 8
        %s626 = scalar_lea.vmem %s17, %s625
        %p627 = scmp.lt.s32.totalorder %s31, 1
        %s628 = scalar_select %p627, %s31, 1
        %s629 = smul.addr %s628, 2
        %s630 = smul.addr %s629, 8
        %s631 = scalar_lea.vmem %s0, %s630
        %p632 = scmp.lt.s32.totalorder %s31, 1
        %s633 = scalar_select %p632, %s31, 1
        %s634 = smul.addr %s633, 2
        %s635 = smul.addr %s634, 8
        %s636 = scalar_lea.vmem %s1, %s635
        %p637 = scmp.lt.s32.totalorder %s31, 1
        %s638 = scalar_select %p637, %s31, 1
        %s639 = smul.addr %s638, 2
        %s640 = smul.addr %s639, 8
        %s641 = scalar_lea.vmem %s17, %s640
        %v642 = vld [vmem:[%s631] sm:$0xff]
        %v643 = vld [vmem:[%s631 + $0x8] sm:$0xff]
        %v644 = vld [vmem:[%s2] sm:$0xff]
        %v645 = vld [vmem:[%s636] sm:$0xff]
        %v646 = vld [vmem:[%s636 + $0x8] sm:$0xff]
        %v647 = vld [vmem:[%s3] sm:$0xff]
        %v648 = vld [vmem:[%s3 + $0x8] sm:$0xff]
        %vm649 = vcmask 64512
        %v651 = vsel %vm649, %v645, 0
        %v654 = vsel %vm649, %v646, 0
        %656 = vmatprep.subr.mxu0 %v648
        %657 = vmatpush1.msra.mxu0 %v647
        %658 = vmatprep.subr.mxu0 0.0
        %659 = vmatpush1.msra.mxu0 0.0
        %660 = vmatprep.subr.mxu0 0.0
        %661 = vmatpush1.msra.mxu0 0.0
        %662 = vmatprep.subr.mxu0 0.0
        %663 = vmatpush1.msra.mxu0 0.0
        %664 = vmatprep.subr.mxu0 0.0
        %665 = vmatpush1.msra.mxu0 0.0
        %666 = vmatprep.subr.mxu0 0.0
        %667 = vmatpush1.msra.mxu0 0.0
        %668 = vmatprep.subr.mxu0 0.0
        %669 = vmatpush1.msra.mxu0 0.0
        %670 = vmatprep.subr.mxu0 0.0
        %671 = vmatpush1.msra.mxu0 0.0
        %672 = vmatprep.subr.mxu0 0.0
        %673 = vmatpush1.msra.mxu0 0.0
        %674 = vmatprep.subr.mxu0 0.0
        %675 = vmatpush1.msra.mxu0 0.0
        %676 = vmatprep.subr.mxu0 0.0
        %677 = vmatpush1.msra.mxu0 0.0
        %678 = vmatprep.subr.mxu0 0.0
        %679 = vmatpush1.msra.mxu0 0.0
        %680 = vmatprep.subr.mxu0 0.0
        %681 = vmatpush1.msra.mxu0 0.0
        %682 = vmatprep.subr.mxu0 0.0
        %683 = vmatpush1.msra.mxu0 0.0
        %684 = vmatprep.subr.mxu0 0.0
        %685 = vmatpush1.msra.mxu0 0.0
        %686 = vmatprep.subr.mxu0 0.0
        %687 = vmatpush1.msra.mxu0 0.0
        %688 = vmatprep.subr.mxu0 0.0
        %689 = vmatpush1.msra.mxu0 0.0
        %690 = vmatprep.subr.mxu0 0.0
        %691 = vmatpush1.msra.mxu0 0.0
        %692 = vmatprep.subr.mxu0 0.0
        %693 = vmatpush1.msra.mxu0 0.0
        %694 = vmatprep.subr.mxu0 0.0
        %695 = vmatpush1.msra.mxu0 0.0
        %696 = vmatprep.subr.mxu0 0.0
        %697 = vmatpush1.msra.mxu0 0.0
        %698 = vmatprep.subr.mxu0 0.0
        %699 = vmatpush1.msra.mxu0 0.0
        %700 = vmatprep.subr.mxu0 0.0
        %701 = vmatpush1.msra.mxu0 0.0
        %702 = vmatprep.subr.mxu0 0.0
        %703 = vmatpush1.msra.mxu0 0.0
        %704 = vmatprep.subr.mxu0 0.0
        %705 = vmatpush1.msra.mxu0 0.0
        %706 = vmatprep.subr.mxu0 0.0
        %707 = vmatpush1.msra.mxu0 0.0
        %708 = vmatprep.subr.mxu0 0.0
        %709 = vmatpush1.msra.mxu0 0.0
        %710 = vmatprep.subr.mxu0 0.0
        %711 = vmatpush1.msra.mxu0 0.0
        %712 = vmatprep.subr.mxu0 0.0
        %713 = vmatpush1.msra.mxu0 0.0
        %714 = vmatprep.subr.mxu0 0.0
        %715 = vmatpush1.msra.mxu0 0.0
        %716 = vmatprep.subr.mxu0 0.0
        %717 = vmatpush1.msra.mxu0 0.0
        %718 = vmatprep.subr.mxu0 0.0
        %719 = vmatpush1.msra.mxu0 0.0
        %720 = vmatprep.mubr.f32.mxu0 0.0
        %721 = vmatmul.mubr.f32.gmra.mrb[0].mxu0 %v651
        %v722 = vpop.f32.mrb[0].mxu0
        %v723 = vadd.f32 0.0, %v722
        %v724 = vpop.f32.mrb[0].mxu0
        %v725 = vadd.f32 0.0, %v724
        %726 = vmatprep.mubr.f32.mxu0 0.0
        %727 = vmatmul.mubr.f32.gmra.mrb[0].mxu0 %v654
        %v728 = vpop.f32.mrb[0].mxu0
        %v729 = vadd.f32 0.0, %v728
        %v730 = vpop.f32.mrb[0].mxu0
        %v731 = vadd.f32 0.0, %v730
        %732 = vdwg.mxu0
        %v734 = vcombine.high %v644, %v644
        %vm735 = vcmask 31744
        %v737 = vsel %vm735, %v642, 0
        %v740 = vsel %vm735, %v643, 0
        %vm742 = vcmask 1043456
        %v743 = vsel %vm742, %v644, 0
        %v745 = vsel %vm742, %v734, 0
        %747 = vmatprep.subr.mxu0 %v745
        %748 = vmatpush1.msra.mxu0 %v743
        %749 = vmatprep.subr.mxu0 0.0
        %750 = vmatpush1.msra.mxu0 0.0
        %751 = vmatprep.subr.mxu0 0.0
        %752 = vmatpush1.msra.mxu0 0.0
        %753 = vmatprep.subr.mxu0 0.0
        %754 = vmatpush1.msra.mxu0 0.0
        %755 = vmatprep.subr.mxu0 0.0
        %756 = vmatpush1.msra.mxu0 0.0
        %757 = vmatprep.subr.mxu0 0.0
        %758 = vmatpush1.msra.mxu0 0.0
        %759 = vmatprep.subr.mxu0 0.0
        %760 = vmatpush1.msra.mxu0 0.0
        %761 = vmatprep.subr.mxu0 0.0
        %762 = vmatpush1.msra.mxu0 0.0
        %763 = vmatprep.subr.mxu0 0.0
        %764 = vmatpush1.msra.mxu0 0.0
        %765 = vmatprep.subr.mxu0 0.0
        %766 = vmatpush1.msra.mxu0 0.0
        %767 = vmatprep.subr.mxu0 0.0
        %768 = vmatpush1.msra.mxu0 0.0
        %769 = vmatprep.subr.mxu0 0.0
        %770 = vmatpush1.msra.mxu0 0.0
        %771 = vmatprep.subr.mxu0 0.0
        %772 = vmatpush1.msra.mxu0 0.0
        %773 = vmatprep.subr.mxu0 0.0
        %774 = vmatpush1.msra.mxu0 0.0
        %775 = vmatprep.subr.mxu0 0.0
        %776 = vmatpush1.msra.mxu0 0.0
        %777 = vmatprep.subr.mxu0 0.0
        %778 = vmatpush1.msra.mxu0 0.0
        %779 = vmatprep.subr.mxu0 0.0
        %780 = vmatpush1.msra.mxu0 0.0
        %781 = vmatprep.subr.mxu0 0.0
        %782 = vmatpush1.msra.mxu0 0.0
        %783 = vmatprep.subr.mxu0 0.0
        %784 = vmatpush1.msra.mxu0 0.0
        %785 = vmatprep.subr.mxu0 0.0
        %786 = vmatpush1.msra.mxu0 0.0
        %787 = vmatprep.subr.mxu0 0.0
        %788 = vmatpush1.msra.mxu0 0.0
        %789 = vmatprep.subr.mxu0 0.0
        %790 = vmatpush1.msra.mxu0 0.0
        %791 = vmatprep.subr.mxu0 0.0
        %792 = vmatpush1.msra.mxu0 0.0
        %793 = vmatprep.subr.mxu0 0.0
        %794 = vmatpush1.msra.mxu0 0.0
        %795 = vmatprep.subr.mxu0 0.0
        %796 = vmatpush1.msra.mxu0 0.0
        %797 = vmatprep.subr.mxu0 0.0
        %798 = vmatpush1.msra.mxu0 0.0
        %799 = vmatprep.subr.mxu0 0.0
        %800 = vmatpush1.msra.mxu0 0.0
        %801 = vmatprep.subr.mxu0 0.0
        %802 = vmatpush1.msra.mxu0 0.0
        %803 = vmatprep.subr.mxu0 0.0
        %804 = vmatpush1.msra.mxu0 0.0
        %805 = vmatprep.subr.mxu0 0.0
        %806 = vmatpush1.msra.mxu0 0.0
        %807 = vmatprep.subr.mxu0 0.0
        %808 = vmatpush1.msra.mxu0 0.0
        %809 = vmatprep.subr.mxu0 0.0
        %810 = vmatpush1.msra.mxu0 0.0
        %811 = vmatprep.mubr.f32.mxu0 0.0
        %812 = vmatmul.mubr.f32.gmra.mrb[0].mxu0 %v737
        %v813 = vpop.f32.mrb[0].mxu0
        %v814 = vadd.f32 %v723, %v813
        %v815 = vpop.f32.mrb[0].mxu0
        %v816 = vadd.f32 %v725, %v815
        %817 = vmatprep.mubr.f32.mxu0 0.0
        %818 = vmatmul.mubr.f32.gmra.mrb[0].mxu0 %v740
        %v819 = vpop.f32.mrb[0].mxu0
        %v820 = vadd.f32 %v729, %v819
        %v821 = vpop.f32.mrb[0].mxu0
        %v822 = vadd.f32 %v731, %v821
        %823 = vdwg.mxu0
        %v824 = vrot.slane %v816, 4
        %v825 = vrot.slane %v822, 4
        %v826 = vlaneseq
        %v827 = vshrl.u32 %v826, 7
        %vm828 = vcmp.lt.s32.totalorder %v827, 4
        %v829 = vsel %vm828, %v824, %v825
        %v830 = vsel %vm828, %v825, %v824
        %v831 = vadd.f32 %v814, %v829
        %v832 = vadd.f32 %v820, %v830
        %v833 = vld [vmem:[%s4] sm:$0x1]
        %v835 = vlaneseq
        %v836 = vshrl.u32 %v835, 7
        %v837 = vsub.s32 0, %v836
        %v838 = vrot.slane %v833, %v837
        %v840 = vadd.f32 %v831, %v838
        %v841 = vadd.f32 %v832, %v838
        %v842 = vmax.f32 %v840, 0.0
        %v843 = vmax.f32 %v841, 0.0
        %v844 = vld [vmem:[#allocation2] sm:$0xff]
        %v845 = vld [vmem:[#allocation2 + $0x8] sm:$0xff]
        %v846 = vld [vmem:[#allocation2 + $0x10] sm:$0xff]
        %v847 = vld [vmem:[#allocation2 + $0x18] sm:$0xff]
        %v848 = vld [vmem:[#allocation2 + $0x20] sm:$0xff]
        %v849 = vld [vmem:[#allocation2 + $0x28] sm:$0xff]
        %v850 = vld [vmem:[#allocation2 + $0x30] sm:$0xff]
        %v851 = vld [vmem:[#allocation2 + $0x38] sm:$0xff]
        %v852 = vld [vmem:[#allocation2 + $0x40] sm:$0xff]
        %v853 = vld [vmem:[#allocation2 + $0x48] sm:$0xff]
        %v854 = vld [vmem:[#allocation2 + $0x50] sm:$0xff]
        %v855 = vld [vmem:[#allocation2 + $0x58] sm:$0xff]
        %v856 = vld [vmem:[#allocation2 + $0x60] sm:$0xff]
        %v857 = vld [vmem:[#allocation2 + $0x68] sm:$0xff]
        %v858 = vld [vmem:[#allocation2 + $0x70] sm:$0xff]
        %v859 = vld [vmem:[#allocation2 + $0x78] sm:$0xff]
        %v860 = vld [vmem:[%s6] sm:$0x1]
        %v862 = vlaneseq
        %v863 = vshrl.u32 %v862, 7
        %v864 = vsub.s32 0, %v863
        %v865 = vrot.slane %v860, %v864
        %867 = vmatprep.subr.mxu0 0.0
        %868 = vmatpush1.msra.mxu0 %v844
        %869 = vmatprep.subr.mxu0 0.0
        %870 = vmatpush1.msra.mxu0 %v845
        %871 = vmatprep.subr.mxu0 0.0
        %872 = vmatpush1.msra.mxu0 %v846
        %873 = vmatprep.subr.mxu0 0.0
        %874 = vmatpush1.msra.mxu0 %v847
        %875 = vmatprep.subr.mxu0 0.0
        %876 = vmatpush1.msra.mxu0 %v848
        %877 = vmatprep.subr.mxu0 0.0
        %878 = vmatpush1.msra.mxu0 %v849
        %879 = vmatprep.subr.mxu0 0.0
        %880 = vmatpush1.msra.mxu0 %v850
        %881 = vmatprep.subr.mxu0 0.0
        %882 = vmatpush1.msra.mxu0 %v851
        %883 = vmatprep.subr.mxu0 0.0
        %884 = vmatpush1.msra.mxu0 %v852
        %885 = vmatprep.subr.mxu0 0.0
        %886 = vmatpush1.msra.mxu0 %v853
        %887 = vmatprep.subr.mxu0 0.0
        %888 = vmatpush1.msra.mxu0 %v854
        %889 = vmatprep.subr.mxu0 0.0
        %890 = vmatpush1.msra.mxu0 %v855
        %891 = vmatprep.subr.mxu0 0.0
        %892 = vmatpush1.msra.mxu0 %v856
        %893 = vmatprep.subr.mxu0 0.0
        %894 = vmatpush1.msra.mxu0 %v857
        %895 = vmatprep.subr.mxu0 0.0
        %896 = vmatpush1.msra.mxu0 %v858
        %897 = vmatprep.subr.mxu0 0.0
        %898 = vmatpush1.msra.mxu0 %v859
        %899 = vmatprep.subr.mxu0 0.0
        %900 = vmatpush1.msra.mxu0 0.0
        %901 = vmatprep.subr.mxu0 0.0
        %902 = vmatpush1.msra.mxu0 0.0
        %903 = vmatprep.subr.mxu0 0.0
        %904 = vmatpush1.msra.mxu0 0.0
        %905 = vmatprep.subr.mxu0 0.0
        %906 = vmatpush1.msra.mxu0 0.0
        %907 = vmatprep.subr.mxu0 0.0
        %908 = vmatpush1.msra.mxu0 0.0
        %909 = vmatprep.subr.mxu0 0.0
        %910 = vmatpush1.msra.mxu0 0.0
        %911 = vmatprep.subr.mxu0 0.0
        %912 = vmatpush1.msra.mxu0 0.0
        %913 = vmatprep.subr.mxu0 0.0
        %914 = vmatpush1.msra.mxu0 0.0
        %915 = vmatprep.subr.mxu0 0.0
        %916 = vmatpush1.msra.mxu0 0.0
        %917 = vmatprep.subr.mxu0 0.0
        %918 = vmatpush1.msra.mxu0 0.0
        %919 = vmatprep.subr.mxu0 0.0
        %920 = vmatpush1.msra.mxu0 0.0
        %921 = vmatprep.subr.mxu0 0.0
        %922 = vmatpush1.msra.mxu0 0.0
        %923 = vmatprep.subr.mxu0 0.0
        %924 = vmatpush1.msra.mxu0 0.0
        %925 = vmatprep.subr.mxu0 0.0
        %926 = vmatpush1.msra.mxu0 0.0
        %927 = vmatprep.subr.mxu0 0.0
        %928 = vmatpush1.msra.mxu0 0.0
        %929 = vmatprep.subr.mxu0 0.0
        %930 = vmatpush1.msra.mxu0 0.0
        %931 = vmatprep.mubr.f32.mxu0 0.0
        %932 = vmatmul.mubr.f32.gmra.mrb[0].mxu0 %v842
        %v933 = vpop.f32.mrb[0].mxu0
        %v934 = vadd.f32 %v865, %v933
        %v935 = vpop.f32.mrb[0].mxu0
        %936 = vmatprep.mubr.f32.mxu0 0.0
        %937 = vmatmul.mubr.f32.gmra.mrb[0].mxu0 %v843
        %v938 = vpop.f32.mrb[0].mxu0
        %v939 = vadd.f32 %v865, %v938
        %v940 = vpop.f32.mrb[0].mxu0
        %941 = vdwg.mxu0
        %v942 = vadd.f32 %v934, %v840
        %v943 = vadd.f32 %v939, %v841
        %v944 = vmax.f32 %v942, 0.0
        %v945 = vmax.f32 %v943, 0.0
        %v946 = vld [vmem:[#allocation4] sm:$0xff]
        %v947 = vld [vmem:[#allocation4 + $0x8] sm:$0xff]
        %v948 = vld [vmem:[#allocation4 + $0x10] sm:$0xff]
        %v949 = vld [vmem:[#allocation4 + $0x18] sm:$0xff]
        %v950 = vld [vmem:[#allocation4 + $0x20] sm:$0xff]
        %v951 = vld [vmem:[#allocation4 + $0x28] sm:$0xff]
        %v952 = vld [vmem:[#allocation4 + $0x30] sm:$0xff]
        %v953 = vld [vmem:[#allocation4 + $0x38] sm:$0xff]
        %v954 = vld [vmem:[#allocation4 + $0x40] sm:$0xff]
        %v955 = vld [vmem:[#allocation4 + $0x48] sm:$0xff]
        %v956 = vld [vmem:[#allocation4 + $0x50] sm:$0xff]
        %v957 = vld [vmem:[#allocation4 + $0x58] sm:$0xff]
        %v958 = vld [vmem:[#allocation4 + $0x60] sm:$0xff]
        %v959 = vld [vmem:[#allocation4 + $0x68] sm:$0xff]
        %v960 = vld [vmem:[#allocation4 + $0x70] sm:$0xff]
        %v961 = vld [vmem:[#allocation4 + $0x78] sm:$0xff]
        %v962 = vld [vmem:[#allocation4 + $0x80] sm:$0xff]
        %v963 = vld [vmem:[#allocation4 + $0x88] sm:$0xff]
        %v964 = vld [vmem:[#allocation4 + $0x90] sm:$0xff]
        %v965 = vld [vmem:[#allocation4 + $0x98] sm:$0xff]
        %v966 = vld [vmem:[#allocation4 + $0xa0] sm:$0xff]
        %v967 = vld [vmem:[#allocation4 + $0xa8] sm:$0xff]
        %v968 = vld [vmem:[#allocation4 + $0xb0] sm:$0xff]
        %v969 = vld [vmem:[#allocation4 + $0xb8] sm:$0xff]
        %v970 = vld [vmem:[#allocation4 + $0xc0] sm:$0xff]
        %v971 = vld [vmem:[#allocation4 + $0xc8] sm:$0xff]
        %v972 = vld [vmem:[#allocation4 + $0xd0] sm:$0xff]
        %v973 = vld [vmem:[#allocation4 + $0xd8] sm:$0xff]
        %v974 = vld [vmem:[#allocation4 + $0xe0] sm:$0xff]
        %v975 = vld [vmem:[#allocation4 + $0xe8] sm:$0xff]
        %v976 = vld [vmem:[#allocation4 + $0xf0] sm:$0xff]
        %v977 = vld [vmem:[#allocation4 + $0xf8] sm:$0xff]
        %978 = vmatprep.subr.mxu0 %v947
        %979 = vmatpush1.msra.mxu0 %v946
        %980 = vmatprep.subr.mxu0 %v949
        %981 = vmatpush1.msra.mxu0 %v948
        %982 = vmatprep.subr.mxu0 %v951
        %983 = vmatpush1.msra.mxu0 %v950
        %984 = vmatprep.subr.mxu0 %v953
        %985 = vmatpush1.msra.mxu0 %v952
        %986 = vmatprep.subr.mxu0 %v955
        %987 = vmatpush1.msra.mxu0 %v954
        %988 = vmatprep.subr.mxu0 %v957
        %989 = vmatpush1.msra.mxu0 %v956
        %990 = vmatprep.subr.mxu0 %v959
        %991 = vmatpush1.msra.mxu0 %v958
        %992 = vmatprep.subr.mxu0 %v961
        %993 = vmatpush1.msra.mxu0 %v960
        %994 = vmatprep.subr.mxu0 %v963
        %995 = vmatpush1.msra.mxu0 %v962
        %996 = vmatprep.subr.mxu0 %v965
        %997 = vmatpush1.msra.mxu0 %v964
        %998 = vmatprep.subr.mxu0 %v967
        %999 = vmatpush1.msra.mxu0 %v966
        %1000 = vmatprep.subr.mxu0 %v969
        %1001 = vmatpush1.msra.mxu0 %v968
        %1002 = vmatprep.subr.mxu0 %v971
        %1003 = vmatpush1.msra.mxu0 %v970
        %1004 = vmatprep.subr.mxu0 %v973
        %1005 = vmatpush1.msra.mxu0 %v972
        %1006 = vmatprep.subr.mxu0 %v975
        %1007 = vmatpush1.msra.mxu0 %v974
        %1008 = vmatprep.subr.mxu0 %v977
        %1009 = vmatpush1.msra.mxu0 %v976
        %1010 = vmatprep.subr.mxu0 0.0
        %1011 = vmatpush1.msra.mxu0 0.0
        %1012 = vmatprep.subr.mxu0 0.0
        %1013 = vmatpush1.msra.mxu0 0.0
        %1014 = vmatprep.subr.mxu0 0.0
        %1015 = vmatpush1.msra.mxu0 0.0
        %1016 = vmatprep.subr.mxu0 0.0
        %1017 = vmatpush1.msra.mxu0 0.0
        %1018 = vmatprep.subr.mxu0 0.0
        %1019 = vmatpush1.msra.mxu0 0.0
        %1020 = vmatprep.subr.mxu0 0.0
        %1021 = vmatpush1.msra.mxu0 0.0
        %1022 = vmatprep.subr.mxu0 0.0
        %1023 = vmatpush1.msra.mxu0 0.0
        %1024 = vmatprep.subr.mxu0 0.0
        %1025 = vmatpush1.msra.mxu0 0.0
        %1026 = vmatprep.subr.mxu0 0.0
        %1027 = vmatpush1.msra.mxu0 0.0
        %1028 = vmatprep.subr.mxu0 0.0
        %1029 = vmatpush1.msra.mxu0 0.0
        %1030 = vmatprep.subr.mxu0 0.0
        %1031 = vmatpush1.msra.mxu0 0.0
        %1032 = vmatprep.subr.mxu0 0.0
        %1033 = vmatpush1.msra.mxu0 0.0
        %1034 = vmatprep.subr.mxu0 0.0
        %1035 = vmatpush1.msra.mxu0 0.0
        %1036 = vmatprep.subr.mxu0 0.0
        %1037 = vmatpush1.msra.mxu0 0.0
        %1038 = vmatprep.subr.mxu0 0.0
        %1039 = vmatpush1.msra.mxu0 0.0
        %1040 = vmatprep.subr.mxu0 0.0
        %1041 = vmatpush1.msra.mxu0 0.0
        %1042 = vmatprep.mubr.f32.mxu0 0.0
        %1043 = vmatmul.mubr.f32.gmra.mrb[0].mxu0 %v944
        %v1044 = vpop.f32.mrb[0].mxu0
        %v1045 = vadd.f32 0.0, %v1044
        %v1046 = vpop.f32.mrb[0].mxu0
        %v1047 = vadd.f32 0.0, %v1046
        %1048 = vmatprep.mubr.f32.mxu0 0.0
        %1049 = vmatmul.mubr.f32.gmra.mrb[0].mxu0 %v945
        %v1050 = vpop.f32.mrb[0].mxu0
        %v1051 = vadd.f32 0.0, %v1050
        %v1052 = vpop.f32.mrb[0].mxu0
        %v1053 = vadd.f32 0.0, %v1052
        %1054 = vdwg.mxu0
        %v1055 = vrot.slane %v1047, 2
        %v1056 = vrot.slane %v1053, 2
        %vm1057 = vcmp.lt.s32.totalorder %v827, 6
        %v1058 = vsel %vm1057, %v1055, %v1056
        %v1059 = vsel %vm1057, %v1056, %v1055
        %v1060 = vadd.f32 %v1045, %v1058
        %v1061 = vadd.f32 %v1051, %v1059
        %v1062 = vld [vmem:[%s8] sm:$0x1]
        %v1064 = vlaneseq
        %v1065 = vshrl.u32 %v1064, 7
        %v1066 = vsub.s32 0, %v1065
        %v1067 = vrot.slane %v1062, %v1066
        %v1069 = vadd.f32 %v1060, %v1067
        %v1070 = vadd.f32 %v1061, %v1067
        %v1071 = vmax.f32 %v1069, 0.0
        %v1072 = vmax.f32 %v1070, 0.0
        %v1073 = vld [vmem:[#allocation6] sm:$0xff]
        %v1074 = vld [vmem:[#allocation6 + $0x8] sm:$0xff]
        %v1075 = vld [vmem:[#allocation6 + $0x10] sm:$0xff]
        %v1076 = vld [vmem:[#allocation6 + $0x18] sm:$0xff]
        %v1077 = vld [vmem:[#allocation6 + $0x20] sm:$0xff]
        %v1078 = vld [vmem:[#allocation6 + $0x28] sm:$0xff]
        %v1079 = vld [vmem:[#allocation6 + $0x30] sm:$0xff]
        %v1080 = vld [vmem:[#allocation6 + $0x38] sm:$0xff]
        %v1081 = vld [vmem:[#allocation6 + $0x40] sm:$0xff]
        %v1082 = vld [vmem:[#allocation6 + $0x48] sm:$0xff]
        %v1083 = vld [vmem:[#allocation6 + $0x50] sm:$0xff]
        %v1084 = vld [vmem:[#allocation6 + $0x58] sm:$0xff]
        %v1085 = vld [vmem:[#allocation6 + $0x60] sm:$0xff]
        %v1086 = vld [vmem:[#allocation6 + $0x68] sm:$0xff]
        %v1087 = vld [vmem:[#allocation6 + $0x70] sm:$0xff]
        %v1088 = vld [vmem:[#allocation6 + $0x78] sm:$0xff]
        %v1089 = vld [vmem:[%s10] sm:$0x1]
        %v1091 = vlaneseq
        %v1092 = vshrl.u32 %v1091, 7
        %v1093 = vsub.s32 0, %v1092
        %v1094 = vrot.slane %v1089, %v1093
        %1096 = vmatprep.subr.mxu0 0.0
        %1097 = vmatpush1.msra.mxu0 %v1073
        %1098 = vmatprep.subr.mxu0 0.0
        %1099 = vmatpush1.msra.mxu0 %v1074
        %1100 = vmatprep.subr.mxu0 0.0
        %1101 = vmatpush1.msra.mxu0 %v1075
        %1102 = vmatprep.subr.mxu0 0.0
        %1103 = vmatpush1.msra.mxu0 %v1076
        %1104 = vmatprep.subr.mxu0 0.0
        %1105 = vmatpush1.msra.mxu0 %v1077
        %1106 = vmatprep.subr.mxu0 0.0
        %1107 = vmatpush1.msra.mxu0 %v1078
        %1108 = vmatprep.subr.mxu0 0.0
        %1109 = vmatpush1.msra.mxu0 %v1079
        %1110 = vmatprep.subr.mxu0 0.0
        %1111 = vmatpush1.msra.mxu0 %v1080
        %1112 = vmatprep.subr.mxu0 0.0
        %1113 = vmatpush1.msra.mxu0 %v1081
        %1114 = vmatprep.subr.mxu0 0.0
        %1115 = vmatpush1.msra.mxu0 %v1082
        %1116 = vmatprep.subr.mxu0 0.0
        %1117 = vmatpush1.msra.mxu0 %v1083
        %1118 = vmatprep.subr.mxu0 0.0
        %1119 = vmatpush1.msra.mxu0 %v1084
        %1120 = vmatprep.subr.mxu0 0.0
        %1121 = vmatpush1.msra.mxu0 %v1085
        %1122 = vmatprep.subr.mxu0 0.0
        %1123 = vmatpush1.msra.mxu0 %v1086
        %1124 = vmatprep.subr.mxu0 0.0
        %1125 = vmatpush1.msra.mxu0 %v1087
        %1126 = vmatprep.subr.mxu0 0.0
        %1127 = vmatpush1.msra.mxu0 %v1088
        %1128 = vmatprep.subr.mxu0 0.0
        %1129 = vmatpush1.msra.mxu0 0.0
        %1130 = vmatprep.subr.mxu0 0.0
        %1131 = vmatpush1.msra.mxu0 0.0
        %1132 = vmatprep.subr.mxu0 0.0
        %1133 = vmatpush1.msra.mxu0 0.0
        %1134 = vmatprep.subr.mxu0 0.0
        %1135 = vmatpush1.msra.mxu0 0.0
        %1136 = vmatprep.subr.mxu0 0.0
        %1137 = vmatpush1.msra.mxu0 0.0
        %1138 = vmatprep.subr.mxu0 0.0
        %1139 = vmatpush1.msra.mxu0 0.0
        %1140 = vmatprep.subr.mxu0 0.0
        %1141 = vmatpush1.msra.mxu0 0.0
        %1142 = vmatprep.subr.mxu0 0.0
        %1143 = vmatpush1.msra.mxu0 0.0
        %1144 = vmatprep.subr.mxu0 0.0
        %1145 = vmatpush1.msra.mxu0 0.0
        %1146 = vmatprep.subr.mxu0 0.0
        %1147 = vmatpush1.msra.mxu0 0.0
        %1148 = vmatprep.subr.mxu0 0.0
        %1149 = vmatpush1.msra.mxu0 0.0
        %1150 = vmatprep.subr.mxu0 0.0
        %1151 = vmatpush1.msra.mxu0 0.0
        %1152 = vmatprep.subr.mxu0 0.0
        %1153 = vmatpush1.msra.mxu0 0.0
        %1154 = vmatprep.subr.mxu0 0.0
        %1155 = vmatpush1.msra.mxu0 0.0
        %1156 = vmatprep.subr.mxu0 0.0
        %1157 = vmatpush1.msra.mxu0 0.0
        %1158 = vmatprep.subr.mxu0 0.0
        %1159 = vmatpush1.msra.mxu0 0.0
        %1160 = vmatprep.mubr.f32.mxu0 0.0
        %1161 = vmatmul.mubr.f32.gmra.mrb[0].mxu0 %v1071
        %v1162 = vpop.f32.mrb[0].mxu0
        %v1163 = vadd.f32 %v1094, %v1162
        %v1164 = vpop.f32.mrb[0].mxu0
        %1165 = vmatprep.mubr.f32.mxu0 0.0
        %1166 = vmatmul.mubr.f32.gmra.mrb[0].mxu0 %v1072
        %v1167 = vpop.f32.mrb[0].mxu0
        %v1168 = vadd.f32 %v1094, %v1167
        %v1169 = vpop.f32.mrb[0].mxu0
        %1170 = vdwg.mxu0
        %v1171 = vadd.f32 %v1163, %v1069
        %v1172 = vadd.f32 %v1168, %v1070
        %v1173 = vmax.f32 %v1171, 0.0
        %v1174 = vmax.f32 %v1172, 0.0
        %v1175 = vld [vmem:[#allocation7] sm:$0xff]
        %v1176 = vld [vmem:[#allocation7 + $0x8] sm:$0xff]
        %v1177 = vld [vmem:[#allocation7 + $0x10] sm:$0xff]
        %v1178 = vld [vmem:[#allocation7 + $0x18] sm:$0xff]
        %v1179 = vld [vmem:[#allocation7 + $0x20] sm:$0xff]
        %v1180 = vld [vmem:[#allocation7 + $0x28] sm:$0xff]
        %v1181 = vld [vmem:[#allocation7 + $0x30] sm:$0xff]
        %v1182 = vld [vmem:[#allocation7 + $0x38] sm:$0xff]
        %v1183 = vld [vmem:[#allocation7 + $0x40] sm:$0xff]
        %v1184 = vld [vmem:[#allocation7 + $0x48] sm:$0xff]
        %v1185 = vld [vmem:[#allocation7 + $0x50] sm:$0xff]
        %v1186 = vld [vmem:[#allocation7 + $0x58] sm:$0xff]
        %v1187 = vld [vmem:[#allocation7 + $0x60] sm:$0xff]
        %v1188 = vld [vmem:[#allocation7 + $0x68] sm:$0xff]
        %v1189 = vld [vmem:[#allocation7 + $0x70] sm:$0xff]
        %v1190 = vld [vmem:[#allocation7 + $0x78] sm:$0xff]
        %v1191 = vld [vmem:[#allocation7 + $0x80] sm:$0xff]
        %v1192 = vld [vmem:[#allocation7 + $0x88] sm:$0xff]
        %v1193 = vld [vmem:[#allocation7 + $0x90] sm:$0xff]
        %v1194 = vld [vmem:[#allocation7 + $0x98] sm:$0xff]
        %v1195 = vld [vmem:[#allocation7 + $0xa0] sm:$0xff]
        %v1196 = vld [vmem:[#allocation7 + $0xa8] sm:$0xff]
        %v1197 = vld [vmem:[#allocation7 + $0xb0] sm:$0xff]
        %v1198 = vld [vmem:[#allocation7 + $0xb8] sm:$0xff]
        %v1199 = vld [vmem:[#allocation7 + $0xc0] sm:$0xff]
        %v1200 = vld [vmem:[#allocation7 + $0xc8] sm:$0xff]
        %v1201 = vld [vmem:[#allocation7 + $0xd0] sm:$0xff]
        %v1202 = vld [vmem:[#allocation7 + $0xd8] sm:$0xff]
        %v1203 = vld [vmem:[#allocation7 + $0xe0] sm:$0xff]
        %v1204 = vld [vmem:[#allocation7 + $0xe8] sm:$0xff]
        %v1205 = vld [vmem:[#allocation7 + $0xf0] sm:$0xff]
        %v1206 = vld [vmem:[#allocation7 + $0xf8] sm:$0xff]
        %1207 = vmatprep.subr.mxu0 %v1176
        %1208 = vmatpush1.msra.mxu0 %v1175
        %1209 = vmatprep.subr.mxu0 %v1178
        %1210 = vmatpush1.msra.mxu0 %v1177
        %1211 = vmatprep.subr.mxu0 %v1180
        %1212 = vmatpush1.msra.mxu0 %v1179
        %1213 = vmatprep.subr.mxu0 %v1182
        %1214 = vmatpush1.msra.mxu0 %v1181
        %1215 = vmatprep.subr.mxu0 %v1184
        %1216 = vmatpush1.msra.mxu0 %v1183
        %1217 = vmatprep.subr.mxu0 %v1186
        %1218 = vmatpush1.msra.mxu0 %v1185
        %1219 = vmatprep.subr.mxu0 %v1188
        %1220 = vmatpush1.msra.mxu0 %v1187
        %1221 = vmatprep.subr.mxu0 %v1190
        %1222 = vmatpush1.msra.mxu0 %v1189
        %1223 = vmatprep.subr.mxu0 %v1192
        %1224 = vmatpush1.msra.mxu0 %v1191
        %1225 = vmatprep.subr.mxu0 %v1194
        %1226 = vmatpush1.msra.mxu0 %v1193
        %1227 = vmatprep.subr.mxu0 %v1196
        %1228 = vmatpush1.msra.mxu0 %v1195
        %1229 = vmatprep.subr.mxu0 %v1198
        %1230 = vmatpush1.msra.mxu0 %v1197
        %1231 = vmatprep.subr.mxu0 %v1200
        %1232 = vmatpush1.msra.mxu0 %v1199
        %1233 = vmatprep.subr.mxu0 %v1202
        %1234 = vmatpush1.msra.mxu0 %v1201
        %1235 = vmatprep.subr.mxu0 %v1204
        %1236 = vmatpush1.msra.mxu0 %v1203
        %1237 = vmatprep.subr.mxu0 %v1206
        %1238 = vmatpush1.msra.mxu0 %v1205
        %1239 = vmatprep.subr.mxu0 0.0
        %1240 = vmatpush1.msra.mxu0 0.0
        %1241 = vmatprep.subr.mxu0 0.0
        %1242 = vmatpush1.msra.mxu0 0.0
        %1243 = vmatprep.subr.mxu0 0.0
        %1244 = vmatpush1.msra.mxu0 0.0
        %1245 = vmatprep.subr.mxu0 0.0
        %1246 = vmatpush1.msra.mxu0 0.0
        %1247 = vmatprep.subr.mxu0 0.0
        %1248 = vmatpush1.msra.mxu0 0.0
        %1249 = vmatprep.subr.mxu0 0.0
        %1250 = vmatpush1.msra.mxu0 0.0
        %1251 = vmatprep.subr.mxu0 0.0
        %1252 = vmatpush1.msra.mxu0 0.0
        %1253 = vmatprep.subr.mxu0 0.0
        %1254 = vmatpush1.msra.mxu0 0.0
        %1255 = vmatprep.subr.mxu0 0.0
        %1256 = vmatpush1.msra.mxu0 0.0
        %1257 = vmatprep.subr.mxu0 0.0
        %1258 = vmatpush1.msra.mxu0 0.0
        %1259 = vmatprep.subr.mxu0 0.0
        %1260 = vmatpush1.msra.mxu0 0.0
        %1261 = vmatprep.subr.mxu0 0.0
        %1262 = vmatpush1.msra.mxu0 0.0
        %1263 = vmatprep.subr.mxu0 0.0
        %1264 = vmatpush1.msra.mxu0 0.0
        %1265 = vmatprep.subr.mxu0 0.0
        %1266 = vmatpush1.msra.mxu0 0.0
        %1267 = vmatprep.subr.mxu0 0.0
        %1268 = vmatpush1.msra.mxu0 0.0
        %1269 = vmatprep.subr.mxu0 0.0
        %1270 = vmatpush1.msra.mxu0 0.0
        %1271 = vmatprep.mubr.f32.mxu0 0.0
        %1272 = vmatmul.mubr.f32.gmra.mrb[0].mxu0 %v1173
        %v1273 = vpop.f32.mrb[0].mxu0
        %v1274 = vadd.f32 0.0, %v1273
        %v1275 = vpop.f32.mrb[0].mxu0
        %v1276 = vadd.f32 0.0, %v1275
        %1277 = vmatprep.mubr.f32.mxu0 0.0
        %1278 = vmatmul.mubr.f32.gmra.mrb[0].mxu0 %v1174
        %v1279 = vpop.f32.mrb[0].mxu0
        %v1280 = vadd.f32 0.0, %v1279
        %v1281 = vpop.f32.mrb[0].mxu0
        %v1282 = vadd.f32 0.0, %v1281
        %1283 = vdwg.mxu0
        %v1284 = vrot.slane %v1276, 1
        %v1285 = vrot.slane %v1282, 1
        %vm1286 = vcmp.lt.s32.totalorder %v827, 7
        %v1287 = vsel %vm1286, %v1284, %v1285
        %v1288 = vsel %vm1286, %v1285, %v1284
        %v1289 = vadd.f32 %v1274, %v1287
        %v1290 = vadd.f32 %v1280, %v1288
        %v1291 = vld [vmem:[%s12] sm:$0x1]
        %v1293 = vlaneseq
        %v1294 = vshrl.u32 %v1293, 7
        %v1295 = vsub.s32 0, %v1294
        %v1296 = vrot.slane %v1291, %v1295
        %v1298 = vadd.f32 %v1289, %v1296
        %v1299 = vadd.f32 %v1290, %v1296
        %v1300 = vmax.f32 %v1298, 0.0
        %v1301 = vmax.f32 %v1299, 0.0
        %v1302 = vld [vmem:[#allocation9] sm:$0xff]
        %v1303 = vld [vmem:[#allocation9 + $0x8] sm:$0xff]
        %v1304 = vld [vmem:[#allocation9 + $0x10] sm:$0xff]
        %v1305 = vld [vmem:[#allocation9 + $0x18] sm:$0xff]
        %v1306 = vld [vmem:[#allocation9 + $0x20] sm:$0xff]
        %v1307 = vld [vmem:[#allocation9 + $0x28] sm:$0xff]
        %v1308 = vld [vmem:[#allocation9 + $0x30] sm:$0xff]
        %v1309 = vld [vmem:[#allocation9 + $0x38] sm:$0xff]
        %v1310 = vld [vmem:[#allocation9 + $0x40] sm:$0xff]
        %v1311 = vld [vmem:[#allocation9 + $0x48] sm:$0xff]
        %v1312 = vld [vmem:[#allocation9 + $0x50] sm:$0xff]
        %v1313 = vld [vmem:[#allocation9 + $0x58] sm:$0xff]
        %v1314 = vld [vmem:[#allocation9 + $0x60] sm:$0xff]
        %v1315 = vld [vmem:[#allocation9 + $0x68] sm:$0xff]
        %v1316 = vld [vmem:[#allocation9 + $0x70] sm:$0xff]
        %v1317 = vld [vmem:[#allocation9 + $0x78] sm:$0xff]
        %v1318 = vld [vmem:[%s14] sm:$0x1]
        %v1320 = vlaneseq
        %v1321 = vshrl.u32 %v1320, 7
        %v1322 = vsub.s32 0, %v1321
        %v1323 = vrot.slane %v1318, %v1322
        %1325 = vmatprep.subr.mxu0 0.0
        %1326 = vmatpush1.msra.mxu0 %v1302
        %1327 = vmatprep.subr.mxu0 0.0
        %1328 = vmatpush1.msra.mxu0 %v1303
        %1329 = vmatprep.subr.mxu0 0.0
        %1330 = vmatpush1.msra.mxu0 %v1304
        %1331 = vmatprep.subr.mxu0 0.0
        %1332 = vmatpush1.msra.mxu0 %v1305
        %1333 = vmatprep.subr.mxu0 0.0
        %1334 = vmatpush1.msra.mxu0 %v1306
        %1335 = vmatprep.subr.mxu0 0.0
        %1336 = vmatpush1.msra.mxu0 %v1307
        %1337 = vmatprep.subr.mxu0 0.0
        %1338 = vmatpush1.msra.mxu0 %v1308
        %1339 = vmatprep.subr.mxu0 0.0
        %1340 = vmatpush1.msra.mxu0 %v1309
        %1341 = vmatprep.subr.mxu0 0.0
        %1342 = vmatpush1.msra.mxu0 %v1310
        %1343 = vmatprep.subr.mxu0 0.0
        %1344 = vmatpush1.msra.mxu0 %v1311
        %1345 = vmatprep.subr.mxu0 0.0
        %1346 = vmatpush1.msra.mxu0 %v1312
        %1347 = vmatprep.subr.mxu0 0.0
        %1348 = vmatpush1.msra.mxu0 %v1313
        %1349 = vmatprep.subr.mxu0 0.0
        %1350 = vmatpush1.msra.mxu0 %v1314
        %1351 = vmatprep.subr.mxu0 0.0
        %1352 = vmatpush1.msra.mxu0 %v1315
        %1353 = vmatprep.subr.mxu0 0.0
        %1354 = vmatpush1.msra.mxu0 %v1316
        %1355 = vmatprep.subr.mxu0 0.0
        %1356 = vmatpush1.msra.mxu0 %v1317
        %1357 = vmatprep.subr.mxu0 0.0
        %1358 = vmatpush1.msra.mxu0 0.0
        %1359 = vmatprep.subr.mxu0 0.0
        %1360 = vmatpush1.msra.mxu0 0.0
        %1361 = vmatprep.subr.mxu0 0.0
        %1362 = vmatpush1.msra.mxu0 0.0
        %1363 = vmatprep.subr.mxu0 0.0
        %1364 = vmatpush1.msra.mxu0 0.0
        %1365 = vmatprep.subr.mxu0 0.0
        %1366 = vmatpush1.msra.mxu0 0.0
        %1367 = vmatprep.subr.mxu0 0.0
        %1368 = vmatpush1.msra.mxu0 0.0
        %1369 = vmatprep.subr.mxu0 0.0
        %1370 = vmatpush1.msra.mxu0 0.0
        %1371 = vmatprep.subr.mxu0 0.0
        %1372 = vmatpush1.msra.mxu0 0.0
        %1373 = vmatprep.subr.mxu0 0.0
        %1374 = vmatpush1.msra.mxu0 0.0
        %1375 = vmatprep.subr.mxu0 0.0
        %1376 = vmatpush1.msra.mxu0 0.0
        %1377 = vmatprep.subr.mxu0 0.0
        %1378 = vmatpush1.msra.mxu0 0.0
        %1379 = vmatprep.subr.mxu0 0.0
        %1380 = vmatpush1.msra.mxu0 0.0
        %1381 = vmatprep.subr.mxu0 0.0
        %1382 = vmatpush1.msra.mxu0 0.0
        %1383 = vmatprep.subr.mxu0 0.0
        %1384 = vmatpush1.msra.mxu0 0.0
        %1385 = vmatprep.subr.mxu0 0.0
        %1386 = vmatpush1.msra.mxu0 0.0
        %1387 = vmatprep.subr.mxu0 0.0
        %1388 = vmatpush1.msra.mxu0 0.0
        %1389 = vmatprep.mubr.f32.mxu0 0.0
        %1390 = vmatmul.mubr.f32.gmra.mrb[0].mxu0 %v1300
        %v1391 = vpop.f32.mrb[0].mxu0
        %v1392 = vadd.f32 %v1323, %v1391
        %v1393 = vpop.f32.mrb[0].mxu0
        %1394 = vmatprep.mubr.f32.mxu0 0.0
        %1395 = vmatmul.mubr.f32.gmra.mrb[0].mxu0 %v1301
        %v1396 = vpop.f32.mrb[0].mxu0
        %v1397 = vadd.f32 %v1323, %v1396
        %v1398 = vpop.f32.mrb[0].mxu0
        %1399 = vdwg.mxu0
        %v1400 = vadd.f32 %v1392, %v1298
        %v1401 = vadd.f32 %v1397, %v1299
        %v1402 = vmax.f32 %v1400, 0.0
        %v1403 = vmax.f32 %v1401, 0.0
        %v1404 = vld [vmem:[%s15] sm:$0xff]
        %v1405 = vld [vmem:[%s15 + $0x8] sm:$0xff]
        %v1406 = vld [vmem:[%s15 + $0x10] sm:$0xff]
        %v1407 = vld [vmem:[%s15 + $0x18] sm:$0xff]
        %v1408 = vld [vmem:[%s15 + $0x20] sm:$0xff]
        %v1409 = vld [vmem:[%s15 + $0x28] sm:$0xff]
        %v1410 = vld [vmem:[%s15 + $0x30] sm:$0xff]
        %v1411 = vld [vmem:[%s15 + $0x38] sm:$0xff]
        %v1412 = vld [vmem:[%s15 + $0x40] sm:$0xff]
        %v1413 = vld [vmem:[%s15 + $0x48] sm:$0xff]
        %v1414 = vld [vmem:[%s15 + $0x50] sm:$0xff]
        %v1415 = vld [vmem:[%s15 + $0x58] sm:$0xff]
        %v1416 = vld [vmem:[%s15 + $0x60] sm:$0xff]
        %v1417 = vld [vmem:[%s15 + $0x68] sm:$0xff]
        %v1418 = vld [vmem:[%s15 + $0x70] sm:$0xff]
        %v1419 = vld [vmem:[%s15 + $0x78] sm:$0xff]
        %v1420 = vld [vmem:[%s16] sm:$0x1]
        %v1422 = vlaneseq
        %v1423 = vshrl.u32 %v1422, 7
        %v1424 = vsub.s32 0, %v1423
        %v1425 = vrot.slane %v1420, %v1424
        %1427 = vmatprep.subr.mxu0 0.0
        %1428 = vmatpush1.msra.mxu0 %v1404
        %1429 = vmatprep.subr.mxu0 0.0
        %1430 = vmatpush1.msra.mxu0 %v1405
        %1431 = vmatprep.subr.mxu0 0.0
        %1432 = vmatpush1.msra.mxu0 %v1406
        %1433 = vmatprep.subr.mxu0 0.0
        %1434 = vmatpush1.msra.mxu0 %v1407
        %1435 = vmatprep.subr.mxu0 0.0
        %1436 = vmatpush1.msra.mxu0 %v1408
        %1437 = vmatprep.subr.mxu0 0.0
        %1438 = vmatpush1.msra.mxu0 %v1409
        %1439 = vmatprep.subr.mxu0 0.0
        %1440 = vmatpush1.msra.mxu0 %v1410
        %1441 = vmatprep.subr.mxu0 0.0
        %1442 = vmatpush1.msra.mxu0 %v1411
        %1443 = vmatprep.subr.mxu0 0.0
        %1444 = vmatpush1.msra.mxu0 %v1412
        %1445 = vmatprep.subr.mxu0 0.0
        %1446 = vmatpush1.msra.mxu0 %v1413
        %1447 = vmatprep.subr.mxu0 0.0
        %1448 = vmatpush1.msra.mxu0 %v1414
        %1449 = vmatprep.subr.mxu0 0.0
        %1450 = vmatpush1.msra.mxu0 %v1415
        %1451 = vmatprep.subr.mxu0 0.0
        %1452 = vmatpush1.msra.mxu0 %v1416
        %1453 = vmatprep.subr.mxu0 0.0
        %1454 = vmatpush1.msra.mxu0 %v1417
        %1455 = vmatprep.subr.mxu0 0.0
        %1456 = vmatpush1.msra.mxu0 %v1418
        %1457 = vmatprep.subr.mxu0 0.0
        %1458 = vmatpush1.msra.mxu0 %v1419
        %1459 = vmatprep.subr.mxu0 0.0
        %1460 = vmatpush1.msra.mxu0 0.0
        %1461 = vmatprep.subr.mxu0 0.0
        %1462 = vmatpush1.msra.mxu0 0.0
        %1463 = vmatprep.subr.mxu0 0.0
        %1464 = vmatpush1.msra.mxu0 0.0
        %1465 = vmatprep.subr.mxu0 0.0
        %1466 = vmatpush1.msra.mxu0 0.0
        %1467 = vmatprep.subr.mxu0 0.0
        %1468 = vmatpush1.msra.mxu0 0.0
        %1469 = vmatprep.subr.mxu0 0.0
        %1470 = vmatpush1.msra.mxu0 0.0
        %1471 = vmatprep.subr.mxu0 0.0
        %1472 = vmatpush1.msra.mxu0 0.0
        %1473 = vmatprep.subr.mxu0 0.0
        %1474 = vmatpush1.msra.mxu0 0.0
        %1475 = vmatprep.subr.mxu0 0.0
        %1476 = vmatpush1.msra.mxu0 0.0
        %1477 = vmatprep.subr.mxu0 0.0
        %1478 = vmatpush1.msra.mxu0 0.0
        %1479 = vmatprep.subr.mxu0 0.0
        %1480 = vmatpush1.msra.mxu0 0.0
        %1481 = vmatprep.subr.mxu0 0.0
        %1482 = vmatpush1.msra.mxu0 0.0
        %1483 = vmatprep.subr.mxu0 0.0
        %1484 = vmatpush1.msra.mxu0 0.0
        %1485 = vmatprep.subr.mxu0 0.0
        %1486 = vmatpush1.msra.mxu0 0.0
        %1487 = vmatprep.subr.mxu0 0.0
        %1488 = vmatpush1.msra.mxu0 0.0
        %1489 = vmatprep.subr.mxu0 0.0
        %1490 = vmatpush1.msra.mxu0 0.0
        %1491 = vmatprep.mubr.f32.mxu0 0.0
        %1492 = vmatmul.mubr.f32.gmra.mrb[0].mxu0 %v1402
        %v1493 = vpop.f32.mrb[0].mxu0
        %v1494 = vadd.f32 %v1425, %v1493
        %v1495 = vpop.f32.mrb[0].mxu0
        %1496 = vmatprep.mubr.f32.mxu0 0.0
        %1497 = vmatmul.mubr.f32.gmra.mrb[0].mxu0 %v1403
        %v1498 = vpop.f32.mrb[0].mxu0
        %v1499 = vadd.f32 %v1425, %v1498
        %v1500 = vpop.f32.mrb[0].mxu0
        %1501 = vdwg.mxu0
        %1502 = vst [vmem:[%s641] sm:$0xff] %v1494
        %1503 = vst [vmem:[%s641 + $0x8] sm:$0x1] %v1499
        %p1504 = scmp.lt.s32.totalorder %s31, 1
        %s1505 = scalar_select %p1504, %s31, 1
        %s1506 = smul.addr %s1505, 2
        %s1507 = smul.addr %s1506, 8
        %s1508 = scalar_lea.vmem %s17, %s1507
        // Predicated region
        $region109: #{subband_fftnet_forward.1} parent=87 // pred_check
          %p1509 = pneg %p416
        $region110: #{subband_fftnet_forward.1} parent=87 // pred_check_branch
          %1511 = sbr.rel (%p1509) target = $region112
        $region111: #{subband_fftnet_forward.1} parent=87 // pred_region
          _
        $region112: #{subband_fftnet_forward.1} parent=87 // pred_fallthru
          _
      $region88: #{subband_fftnet_forward.1} parent=5 // pred_fallthru
        _
      %p1512 = scmp.le.s32.totalorder 2, %s26
      // Predicated region
      $region113: #{subband_fftnet_forward.1} parent=5 // pred_check
        %p1513 = pneg %p1512
      $region114: #{subband_fftnet_forward.1} parent=5 // pred_check_branch
        %1515 = sbr.rel (%p1513) target = $region116
      $region115: #{subband_fftnet_forward.1} parent=5 // pred_region
        %s1516 = ssub.s32 %s26, 2
        // Predicated region
        $region117: #{subband_fftnet_forward.1} parent=115 // pred_check
          %p1517 = pneg %p422
        $region118: #{subband_fftnet_forward.1} parent=115 // pred_check_branch
          %1519 = sbr.rel (%p1517) target = $region120
        $region119: #{subband_fftnet_forward.1} parent=115 // pred_region
          %p1520 = scmp.lt.s32.totalorder %s32, 1
          %s1521 = scalar_select %p1520, %s32, 1
          %s1522 = smul.addr %s1521, 2
          %s1523 = smul.addr %s1522, 8
          %s1524 = scalar_lea.vmem %s17, %s1523
        $region120: #{subband_fftnet_forward.1} parent=115 // pred_fallthru
          _
      $region116: #{subband_fftnet_forward.1} parent=5 // pred_fallthru
        _
    $region6: #{subband_fftnet_forward.1} parent=1 // loop_footer
      %s30 = sadd.s32 1, %s26
    $region7: #{subband_fftnet_forward.1} parent=1 // loop_footer_branch
      %25 = sbr.rel target = $region3
    $region8: #{subband_fftnet_forward.1} parent=1 // loop_exit
      _
    %1525 = vsyncpa [#allocation3], 1
    %s1526 = scalar_lea.sflag [#allocation3], 1
    %1527 = vsyncpa %s1526, 1
    %1528 = vsyncpa [#allocation5], 1
    %1529 = vsyncpa [#allocation8], 1

</llo_original>
